<compile_context>
chip_gen: v6e
topology: v6e:2x2x1
jax: 0.10.0
libtpu: 0.0.40
codegen_flags: <defaults>
</compile_context>

<pallas_src>
import math
import functools

import numpy as np
import jax
import jax.numpy as jnp
from jax import lax
from jax.experimental import pallas as pl
from jax.experimental.pallas import tpu as pltpu


def _round_up(x, m):
    return (x + m - 1) // m * m


# ----------------------------------------------------------------------------
# Fused kernel: conv1+ReLU -> conv2+ReLU -> Linear -> (+ pos-enc + bias)
# ----------------------------------------------------------------------------
def _subsample2_fused_kernel(x_ref, w1_ref, b1_ref, w2_ref, b2_ref, wl_ref,
                             pe_ref, o_ref, h1_ref, *, Bb, T_pad, T1p, T2p):
    """One grid step = Bb batch items, batch folded into the matmul M axis.

    x_ref  : (Bb*T_pad, idim)   f32   zero-padded input rows
    w1_ref : (3*idim, N1p)      bf16  conv1, 3 time taps folded along K
    b1_ref : (1, N1p)           f32
    w2_ref : (3*N1p, N2p)       bf16  conv2, 3 time taps folded along K
    b2_ref : (1, N2p)           f32
    wl_ref : (N2p, Nout)        bf16  linear (rows permuted, xscale folded)
    pe_ref : (Bb*T2p, Nout)     f32   pos-enc + linear bias, pre-tiled
    o_ref  : (Bb*T2p, Nout)     f32   lane-dense (Nout mult of 128), aligned rows
    h1_ref : (Bb*T1p, N1p)      f32   VMEM scratch for conv1 activations
    """
    f32 = jnp.float32
    bf16 = jnp.bfloat16

    # --- conv1: Conv2d(1, odim, 3, stride=2) + ReLU --------------------------
    # Strided ref loads gather the 3 time taps per batch item; taps are
    # concatenated along K (lanes) and batch items along M -> ONE MXU matmul.
    parts = []
    for b in range(Bb):                           # static unroll, Bb is small
        base = b * T_pad
        taps = [x_ref[pl.ds(base + i, T1p, stride=2), :] for i in range(3)]
        parts.append(jnp.concatenate(taps, axis=-1))          # (T1p, 3*idim)
    lhs1 = jnp.concatenate(parts, axis=0).astype(bf16)        # (Bb*T1p, 3*idim)
    h1 = jnp.dot(lhs1, w1_ref[...], preferred_element_type=f32)
    h1 = jnp.maximum(h1 + b1_ref[...], 0.0)                   # (Bb*T1p, N1p)
    # Stage h1 in VMEM scratch so the conv2 +0/+1/+2 row taps are offset
    # ref loads, not value relayouts.
    h1_ref[...] = h1

    # --- conv2: Conv2d(odim, odim, 3, stride=1) + ReLU ------------------------
    parts2 = []
    for b in range(Bb):
        base = b * T1p
        taps = [h1_ref[pl.ds(base + i, T2p), :] for i in range(3)]
        parts2.append(jnp.concatenate(taps, axis=-1))          # (T2p, 3*N1p)
    lhs2 = jnp.concatenate(parts2, axis=0).astype(bf16)        # (Bb*T2p, 3*N1p)
    h2 = jnp.dot(lhs2, w2_ref[...], preferred_element_type=f32)
    h2 = jnp.maximum(h2 + b2_ref[...], 0.0)                    # (Bb*T2p, N2p)

    # --- Linear (xscale folded in W) + (pos-enc + bias) epilogue --------------
    y = jnp.dot(h2.astype(bf16), wl_ref[...], preferred_element_type=f32)
    o_ref[...] = (y + pe_ref[...]).astype(o_ref.dtype)


def conv2d_subsampling2_forward(x, x_mask, prep):
    """x: (B, T, idim) f32.  prep: output of prepare_params() for the same T/idim."""
    d = prep["dims"]
    B, T, idim = x.shape
    assert T == d["T"] and idim == d["idim"], (x.shape, d)
    Bb, T_pad, T1p, T2p = d["Bb"], d["T_pad"], d["T1p"], d["T2p"]
    T2, odim = d["T2"], d["odim"]
    N1p, N2p, Nout = d["N1p"], d["N2p"], d["Nout"]

    # Pad batch to a multiple of Bb and time to T_pad; flatten (B, T) -> rows
    # (free, row-major) so the kernel sees a 2-D (rows, idim) block.
    B_pad = _round_up(B, Bb)
    xp = jnp.pad(x, ((0, B_pad - B), (0, T_pad - T), (0, 0)))
    x2 = xp.reshape(B_pad * T_pad, idim)

    kern = functools.partial(_subsample2_fused_kernel,
                             Bb=Bb, T_pad=T_pad, T1p=T1p, T2p=T2p)
    out = pl.pallas_call(
        kern,
        out_shape=jax.ShapeDtypeStruct((B_pad * T2p, Nout), jnp.float32),
        grid=(B_pad // Bb,),
        in_specs=[
            pl.BlockSpec((Bb * T_pad, idim), lambda g: (g, 0)),   # x rows
            pl.BlockSpec((3 * idim, N1p), lambda g: (0, 0)),      # w1 (folded)
            pl.BlockSpec((1, N1p), lambda g: (0, 0)),             # b1
            pl.BlockSpec((3 * N1p, N2p), lambda g: (0, 0)),       # w2 (folded)
            pl.BlockSpec((1, N2p), lambda g: (0, 0)),             # b2
            pl.BlockSpec((N2p, Nout), lambda g: (0, 0)),          # w_lin
            pl.BlockSpec((Bb * T2p, Nout), lambda g: (0, 0)),     # pe + bias
        ],
        out_specs=pl.BlockSpec((Bb * T2p, Nout), lambda g: (g, 0)),
        scratch_shapes=[pltpu.VMEM((Bb * T1p, N1p), jnp.float32)],
        compiler_params=pltpu.CompilerParams(
            dimension_semantics=("parallel",)),
    )(x2, prep["w1m"], prep["b1t"], prep["w2m"], prep["b2t"],
      prep["wl"], prep["pe"])

    # Strip lane / row / batch padding (outside the kernel).
    out = out.reshape(B_pad, T2p, Nout)[:B, :T2, :odim]
    if x_mask is None:
        return out, None
    return out, x_mask[:, :, :-2:2][:, :, :-2]


# ----------------------------------------------------------------------------
# Host-side one-time parameter preparation (folds im2col, transpose, xscale)
# ----------------------------------------------------------------------------
def positional_encoding(length, d):
    """ESPnet PositionalEncoding table (sin on even dims, cos on odd dims)."""
    position = np.arange(length, dtype=np.float32)[:, None]
    div_term = np.exp(np.arange(0, d, 2, dtype=np.float32)
                      * -(math.log(10000.0) / d))
    pe = np.zeros((length, d), np.float32)
    pe[:, 0::2] = np.sin(position * div_term)
    pe[:, 1::2] = np.cos(position * div_term)
    return pe


def prepare_params(params, T, idim, odim, batch_block=4):
    """Fold conv im2col structure, tap fusion, flatten-permutation, xscale and
    the linear bias into bf16 weights / f32 tables (one-time host cost).

    Expected params:
      w1: HWIO (3,3,1,odim)      b1: (1,odim)
      w2: HWIO (3,3,odim,odim)   b2: (1,odim)
      w_lin: (odim*F2, odim) with PyTorch channel-major row index c*F2+f
      b_lin: (1,odim)
    """
    F1 = (idim - 3) // 2 + 1
    F2 = F1 - 2
    T1 = (T - 3) // 2 + 1
    T2 = T1 - 2
    Bb = batch_block

    N1, N2 = F1 * odim, F2 * odim
    N1p = _round_up(N1, 128)            # lane-aligned conv1 output width
    N2p = _round_up(N2, 128)            # lane-aligned conv2 output width
    Nout = _round_up(odim, 128)         # lane-dense output width
    T2p = _round_up(T2, 8)              # sublane-aligned output rows / item
    T1p = _round_up(T2p + 2, 8)         # h1 rows / item needed by conv2
    T_pad = _round_up(2 * T1p + 1, 8)   # input rows / item needed by conv1

    w1 = np.asarray(params["w1"], np.float32)
    w2 = np.asarray(params["w2"], np.float32)
    w_lin = np.asarray(params["w_lin"], np.float32)
    b1 = np.asarray(params["b1"], np.float32).reshape(1, odim)
    b2 = np.asarray(params["b2"], np.float32).reshape(1, odim)
    b_lin = np.asarray(params["b_lin"], np.float32).reshape(1, odim)

    # conv1 as ONE matmul: lhs1 column i*idim + d  <->  x[2t+i, d]
    #   w1m[i*idim + 2f+j, f*odim+c] = w1[i, j, 0, c]
    w1m = np.zeros((3 * idim, N1p), np.float32)
    for i in range(3):
        for j in range(3):
            for f in range(F1):
                w1m[i * idim + 2 * f + j, f * odim:(f + 1) * odim] = w1[i, j, 0, :]

    # conv2 as ONE matmul: lhs2 column i*N1p + fj*odim + ci  <->  h1[t+i, fj, ci]
    #   w2m[i*N1p + (f+j)*odim + ci, f*odim + c] = w2[i, j, ci, c]
    w2m = np.zeros((3 * N1p, N2p), np.float32)
    for i in range(3):
        for j in range(3):
            for f in range(F2):
                w2m[i * N1p + (f + j) * odim:i * N1p + (f + j + 1) * odim,
                    f * odim:(f + 1) * odim] = w2[i, j, :, :]

    # Linear: permute rows from PyTorch channel-major flatten (c*F2+f) to our
    # freq-major flatten (f*odim+c); fold xscale; pad to (N2p, Nout).
    xscale = math.sqrt(odim)
    k = np.arange(F2 * odim)
    f_idx, c_idx = k // odim, k % odim
    wl = np.zeros((N2p, Nout), np.float32)
    wl[:N2, :odim] = w_lin[c_idx * F2 + f_idx, :] * xscale

    # Conv biases tiled to the freq-major flattened, lane-padded layouts.
    b1t = np.zeros((1, N1p), np.float32)
    b1t[0, :N1] = np.tile(b1[0], F1)
    b2t = np.zeros((1, N2p), np.float32)
    b2t[0, :N2] = np.tile(b2[0], F2)

    # Positional encoding + (linear bias * xscale) folded; pre-tiled over the
    # Bb batch items of one grid step; lane-padded to Nout.
    pe = np.zeros((T2p, Nout), np.float32)
    pe[:, :odim] = positional_encoding(T2p, odim) + b_lin[0] * xscale
    pe = np.tile(pe, (Bb, 1))                     # (Bb*T2p, Nout)

    return {
        "w1m": jnp.asarray(w1m, jnp.bfloat16),
        "b1t": jnp.asarray(b1t),
        "w2m": jnp.asarray(w2m, jnp.bfloat16),
        "b2t": jnp.asarray(b2t),
        "wl": jnp.asarray(wl, jnp.bfloat16),
        "pe": jnp.asarray(pe),
        "dims": dict(T=T, idim=idim, odim=odim, Bb=Bb, T_pad=T_pad,
                     T1p=T1p, T2p=T2p, T1=T1, T2=T2,
                     N1p=N1p, N2p=N2p, Nout=Nout),
    }
    # TODO(synk): dropout inside PositionalEncoding is identity at rate=0 /
    # eval mode and is not implemented.


# ----------------------------------------------------------------------------
# Pure-JAX reference (uses the original, unfolded f32 parameters)
# ----------------------------------------------------------------------------
def reference_forward(x, x_mask, params, idim, odim):
    h = x[..., None]
    h = lax.conv_general_dilated(h, params["w1"], (2, 2), "VALID",
                                 dimension_numbers=("NHWC", "HWIO", "NHWC"))
    h = jnp.maximum(h + params["b1"][0], 0.0)
    h = lax.conv_general_dilated(h, params["w2"], (1, 1), "VALID",
                                 dimension_numbers=("NHWC", "HWIO", "NHWC"))
    h = jnp.maximum(h + params["b2"][0], 0.0)
    B, T2, F2, C = h.shape
    h = jnp.transpose(h, (0, 1, 3, 2)).reshape(B, T2, C * F2)
    y = h @ params["w_lin"] + params["b_lin"][0]
    y = y * math.sqrt(odim) + positional_encoding(T2, odim)
    if x_mask is None:
        return y, None
    return y, x_mask[:, :, :-2:2][:, :, :-2]


# ----------------------------------------------------------------------------
if __name__ == "__main__":
    B, T, idim, odim = 8, 32, 16, 32
    F2 = (idim - 1) // 2 - 2                 # linear in_features = odim * F2

    key = jax.random.PRNGKey(0)
    ks = jax.random.split(key, 8)
    x = jax.random.normal(ks[0], (B, T, idim), jnp.float32)
    x_mask = jnp.ones((B, 1, T), dtype=bool)

    params = {
        "w1": jax.random.normal(ks[1], (3, 3, 1, odim), jnp.float32) * 0.1,
        "b1": jax.random.normal(ks[2], (1, odim), jnp.float32) * 0.1,
        "w2": jax.random.normal(ks[3], (3, 3, odim, odim), jnp.float32) * 0.05,
        "b2": jax.random.normal(ks[4], (1, odim), jnp.float32) * 0.1,
        "w_lin": jax.random.normal(ks[5], (odim * F2, odim), jnp.float32) * 0.05,
        "b_lin": jax.random.normal(ks[6], (1, odim), jnp.float32) * 0.1,
    }

    # Bb=4 -> grid=(2,): batch folded into M, and >=2 parallel steps (v7x 2 TCs).
    prep = prepare_params(params, T, idim, odim, batch_block=4)

    out, out_mask = conv2d_subsampling2_forward(x, x_mask, prep)
    out = jax.block_until_ready(out)

    ref, ref_mask = reference_forward(x, x_mask, params, idim, odim)

    T2 = (T - 1) // 2 - 2
    assert out.shape == (B, T2, odim), out.shape
    assert out_mask.shape == (B, 1, T2), out_mask.shape
    assert bool(jnp.all(out_mask == ref_mask))
    max_err = float(jnp.max(jnp.abs(out - ref)))
    # bf16 MXU operands vs f32 reference -> loosened tolerance per review.
    assert bool(jnp.allclose(out, ref, atol=8e-2, rtol=8e-2)), max_err

    print("KERNEL_OK")
</pallas_src>

<mosaic_0001>
module attributes {stable_mosaic.version = 11 : i64} {
  func.func @_subsample2_fused_kernel(%arg0: i32, %arg1: memref<224x16xf32, #tpu.memory_space<vmem>>, %arg2: memref<48x256xbf16, #tpu.memory_space<vmem>>, %arg3: memref<1x256xf32, #tpu.memory_space<vmem>>, %arg4: memref<768x256xbf16, #tpu.memory_space<vmem>>, %arg5: memref<1x256xf32, #tpu.memory_space<vmem>>, %arg6: memref<256x128xbf16, #tpu.memory_space<vmem>>, %arg7: memref<64x128xf32, #tpu.memory_space<vmem>>, %arg8: memref<64x128xf32, #tpu.memory_space<vmem>>, %arg9: memref<96x256xf32, #tpu.memory_space<vmem>>) attributes {dimension_semantics = [#tpu.dimension_semantics<parallel>], iteration_bounds = array<i64: 2>, scalar_prefetch = 0 : i64, scratch_operands = 1 : i64, tpu.core_type = #tpu.core_type<tc>, window_params = [{transform_indices = @transform_0, window_bounds = array<i64: 224, 16>}, {pipeline_mode = #tpu.pipeline_mode<synchronous>, transform_indices = @transform_1, window_bounds = array<i64: 48, 256>}, {pipeline_mode = #tpu.pipeline_mode<synchronous>, transform_indices = @transform_2, window_bounds = array<i64: 1, 256>}, {pipeline_mode = #tpu.pipeline_mode<synchronous>, transform_indices = @transform_3, window_bounds = array<i64: 768, 256>}, {pipeline_mode = #tpu.pipeline_mode<synchronous>, transform_indices = @transform_4, window_bounds = array<i64: 1, 256>}, {pipeline_mode = #tpu.pipeline_mode<synchronous>, transform_indices = @transform_5, window_bounds = array<i64: 256, 128>}, {pipeline_mode = #tpu.pipeline_mode<synchronous>, transform_indices = @transform_6, window_bounds = array<i64: 64, 128>}, {transform_indices = @transform_7, window_bounds = array<i64: 64, 128>}]} {
    %c0 = arith.constant 0 : index
    %c0_0 = arith.constant 0 : index
    %0 = tpu.strided_load %arg1[%c0, %c0_0] {strides = array<i32: 2, 1>} : memref<224x16xf32, #tpu.memory_space<vmem>>, vector<24x16xf32>
    %c1 = arith.constant 1 : index
    %c0_1 = arith.constant 0 : index
    %1 = tpu.strided_load %arg1[%c1, %c0_1] {strides = array<i32: 2, 1>} : memref<224x16xf32, #tpu.memory_space<vmem>>, vector<24x16xf32>
    %c2 = arith.constant 2 : index
    %c0_2 = arith.constant 0 : index
    %2 = tpu.strided_load %arg1[%c2, %c0_2] {strides = array<i32: 2, 1>} : memref<224x16xf32, #tpu.memory_space<vmem>>, vector<24x16xf32>
    %3 = tpu.concatenate %0, %1, %2 in 1 : vector<24x16xf32>, vector<24x16xf32>, vector<24x16xf32> -> vector<24x48xf32>
    %c56 = arith.constant 56 : index
    %c0_3 = arith.constant 0 : index
    %4 = tpu.strided_load %arg1[%c56, %c0_3] {strides = array<i32: 2, 1>} : memref<224x16xf32, #tpu.memory_space<vmem>>, vector<24x16xf32>
    %c57 = arith.constant 57 : index
    %c0_4 = arith.constant 0 : index
    %5 = tpu.strided_load %arg1[%c57, %c0_4] {strides = array<i32: 2, 1>} : memref<224x16xf32, #tpu.memory_space<vmem>>, vector<24x16xf32>
    %c58 = arith.constant 58 : index
    %c0_5 = arith.constant 0 : index
    %6 = tpu.strided_load %arg1[%c58, %c0_5] {strides = array<i32: 2, 1>} : memref<224x16xf32, #tpu.memory_space<vmem>>, vector<24x16xf32>
    %7 = tpu.concatenate %4, %5, %6 in 1 : vector<24x16xf32>, vector<24x16xf32>, vector<24x16xf32> -> vector<24x48xf32>
    %c112 = arith.constant 112 : index
    %c0_6 = arith.constant 0 : index
    %8 = tpu.strided_load %arg1[%c112, %c0_6] {strides = array<i32: 2, 1>} : memref<224x16xf32, #tpu.memory_space<vmem>>, vector<24x16xf32>
    %c113 = arith.constant 113 : index
    %c0_7 = arith.constant 0 : index
    %9 = tpu.strided_load %arg1[%c113, %c0_7] {strides = array<i32: 2, 1>} : memref<224x16xf32, #tpu.memory_space<vmem>>, vector<24x16xf32>
    %c114 = arith.constant 114 : index
    %c0_8 = arith.constant 0 : index
    %10 = tpu.strided_load %arg1[%c114, %c0_8] {strides = array<i32: 2, 1>} : memref<224x16xf32, #tpu.memory_space<vmem>>, vector<24x16xf32>
    %11 = tpu.concatenate %8, %9, %10 in 1 : vector<24x16xf32>, vector<24x16xf32>, vector<24x16xf32> -> vector<24x48xf32>
    %c168 = arith.constant 168 : index
    %c0_9 = arith.constant 0 : index
    %12 = tpu.strided_load %arg1[%c168, %c0_9] {strides = array<i32: 2, 1>} : memref<224x16xf32, #tpu.memory_space<vmem>>, vector<24x16xf32>
    %c169 = arith.constant 169 : index
    %c0_10 = arith.constant 0 : index
    %13 = tpu.strided_load %arg1[%c169, %c0_10] {strides = array<i32: 2, 1>} : memref<224x16xf32, #tpu.memory_space<vmem>>, vector<24x16xf32>
    %c170 = arith.constant 170 : index
    %c0_11 = arith.constant 0 : index
    %14 = tpu.strided_load %arg1[%c170, %c0_11] {strides = array<i32: 2, 1>} : memref<224x16xf32, #tpu.memory_space<vmem>>, vector<24x16xf32>
    %15 = tpu.concatenate %12, %13, %14 in 1 : vector<24x16xf32>, vector<24x16xf32>, vector<24x16xf32> -> vector<24x48xf32>
    %16 = tpu.concatenate %3, %7, %11, %15 in 0 : vector<24x48xf32>, vector<24x48xf32>, vector<24x48xf32>, vector<24x48xf32> -> vector<96x48xf32>
    %17 = arith.truncf %16 : vector<96x48xf32> to vector<96x48xbf16>
    %c0_12 = arith.constant 0 : index
    %c0_13 = arith.constant 0 : index
    %18 = vector.load %arg2[%c0_12, %c0_13] : memref<48x256xbf16, #tpu.memory_space<vmem>>, vector<48x256xbf16>
    %cst = arith.constant dense<0.000000e+00> : vector<96x256xf32>
    %19 = tpu.matmul %17, %18, %cst {dimension_numbers = #tpu.dot_dimension_numbers<[1], [0], [0], [1], [0, 0, 1, 1], [], []>} : vector<96x48xbf16>, vector<48x256xbf16>, vector<96x256xf32> -> vector<96x256xf32>
    %c0_14 = arith.constant 0 : index
    %c0_15 = arith.constant 0 : index
    %20 = vector.load %arg3[%c0_14, %c0_15] : memref<1x256xf32, #tpu.memory_space<vmem>>, vector<1x256xf32>
    %21 = vector.broadcast %20 : vector<1x256xf32> to vector<96x256xf32>
    %22 = arith.addf %19, %21 : vector<96x256xf32>
    %cst_16 = arith.constant 0.000000e+00 : f32
    %23 = vector.broadcast %cst_16 : f32 to vector<96x256xf32>
    %24 = arith.maximumf %22, %23 : vector<96x256xf32>
    %c0_17 = arith.constant 0 : index
    %c0_18 = arith.constant 0 : index
    %25 = vector.load %arg9[%c0_17, %c0_18] : memref<96x256xf32, #tpu.memory_space<vmem>>, vector<96x256xf32>
    tpu.vector_store %arg9[%c0_17, %c0_18], %24 {strides = array<i32>} : memref<96x256xf32, #tpu.memory_space<vmem>>, vector<96x256xf32>,
    %c0_19 = arith.constant 0 : index
    %c0_20 = arith.constant 0 : index
    %26 = vector.load %arg9[%c0_19, %c0_20] : memref<96x256xf32, #tpu.memory_space<vmem>>, vector<16x256xf32>
    %c1_21 = arith.constant 1 : index
    %c0_22 = arith.constant 0 : index
    %27 = vector.load %arg9[%c1_21, %c0_22] : memref<96x256xf32, #tpu.memory_space<vmem>>, vector<16x256xf32>
    %c2_23 = arith.constant 2 : index
    %c0_24 = arith.constant 0 : index
    %28 = vector.load %arg9[%c2_23, %c0_24] : memref<96x256xf32, #tpu.memory_space<vmem>>, vector<16x256xf32>
    %29 = tpu.concatenate %26, %27, %28 in 1 : vector<16x256xf32>, vector<16x256xf32>, vector<16x256xf32> -> vector<16x768xf32>
    %c24 = arith.constant 24 : index
    %c0_25 = arith.constant 0 : index
    %30 = vector.load %arg9[%c24, %c0_25] : memref<96x256xf32, #tpu.memory_space<vmem>>, vector<16x256xf32>
    %c25 = arith.constant 25 : index
    %c0_26 = arith.constant 0 : index
    %31 = vector.load %arg9[%c25, %c0_26] : memref<96x256xf32, #tpu.memory_space<vmem>>, vector<16x256xf32>
    %c26 = arith.constant 26 : index
    %c0_27 = arith.constant 0 : index
    %32 = vector.load %arg9[%c26, %c0_27] : memref<96x256xf32, #tpu.memory_space<vmem>>, vector<16x256xf32>
    %33 = tpu.concatenate %30, %31, %32 in 1 : vector<16x256xf32>, vector<16x256xf32>, vector<16x256xf32> -> vector<16x768xf32>
    %c48 = arith.constant 48 : index
    %c0_28 = arith.constant 0 : index
    %34 = vector.load %arg9[%c48, %c0_28] : memref<96x256xf32, #tpu.memory_space<vmem>>, vector<16x256xf32>
    %c49 = arith.constant 49 : index
    %c0_29 = arith.constant 0 : index
    %35 = vector.load %arg9[%c49, %c0_29] : memref<96x256xf32, #tpu.memory_space<vmem>>, vector<16x256xf32>
    %c50 = arith.constant 50 : index
    %c0_30 = arith.constant 0 : index
    %36 = vector.load %arg9[%c50, %c0_30] : memref<96x256xf32, #tpu.memory_space<vmem>>, vector<16x256xf32>
    %37 = tpu.concatenate %34, %35, %36 in 1 : vector<16x256xf32>, vector<16x256xf32>, vector<16x256xf32> -> vector<16x768xf32>
    %c72 = arith.constant 72 : index
    %c0_31 = arith.constant 0 : index
    %38 = vector.load %arg9[%c72, %c0_31] : memref<96x256xf32, #tpu.memory_space<vmem>>, vector<16x256xf32>
    %c73 = arith.constant 73 : index
    %c0_32 = arith.constant 0 : index
    %39 = vector.load %arg9[%c73, %c0_32] : memref<96x256xf32, #tpu.memory_space<vmem>>, vector<16x256xf32>
    %c74 = arith.constant 74 : index
    %c0_33 = arith.constant 0 : index
    %40 = vector.load %arg9[%c74, %c0_33] : memref<96x256xf32, #tpu.memory_space<vmem>>, vector<16x256xf32>
    %41 = tpu.concatenate %38, %39, %40 in 1 : vector<16x256xf32>, vector<16x256xf32>, vector<16x256xf32> -> vector<16x768xf32>
    %42 = tpu.concatenate %29, %33, %37, %41 in 0 : vector<16x768xf32>, vector<16x768xf32>, vector<16x768xf32>, vector<16x768xf32> -> vector<64x768xf32>
    %43 = arith.truncf %42 : vector<64x768xf32> to vector<64x768xbf16>
    %c0_34 = arith.constant 0 : index
    %c0_35 = arith.constant 0 : index
    %44 = vector.load %arg4[%c0_34, %c0_35] : memref<768x256xbf16, #tpu.memory_space<vmem>>, vector<768x256xbf16>
    %cst_36 = arith.constant dense<0.000000e+00> : vector<64x256xf32>
    %45 = tpu.matmul %43, %44, %cst_36 {dimension_numbers = #tpu.dot_dimension_numbers<[1], [0], [0], [1], [0, 0, 1, 1], [], []>} : vector<64x768xbf16>, vector<768x256xbf16>, vector<64x256xf32> -> vector<64x256xf32>
    %c0_37 = arith.constant 0 : index
    %c0_38 = arith.constant 0 : index
    %46 = vector.load %arg5[%c0_37, %c0_38] : memref<1x256xf32, #tpu.memory_space<vmem>>, vector<1x256xf32>
    %47 = vector.broadcast %46 : vector<1x256xf32> to vector<64x256xf32>
    %48 = arith.addf %45, %47 : vector<64x256xf32>
    %cst_39 = arith.constant 0.000000e+00 : f32
    %49 = vector.broadcast %cst_39 : f32 to vector<64x256xf32>
    %50 = arith.maximumf %48, %49 : vector<64x256xf32>
    %51 = arith.truncf %50 : vector<64x256xf32> to vector<64x256xbf16>
    %c0_40 = arith.constant 0 : index
    %c0_41 = arith.constant 0 : index
    %52 = vector.load %arg6[%c0_40, %c0_41] : memref<256x128xbf16, #tpu.memory_space<vmem>>, vector<256x128xbf16>
    %cst_42 = arith.constant dense<0.000000e+00> : vector<64x128xf32>
    %53 = tpu.matmul %51, %52, %cst_42 {dimension_numbers = #tpu.dot_dimension_numbers<[1], [0], [0], [1], [0, 0, 1, 1], [], []>} : vector<64x256xbf16>, vector<256x128xbf16>, vector<64x128xf32> -> vector<64x128xf32>
    %c0_43 = arith.constant 0 : index
    %c0_44 = arith.constant 0 : index
    %54 = vector.load %arg7[%c0_43, %c0_44] : memref<64x128xf32, #tpu.memory_space<vmem>>, vector<64x128xf32>
    %55 = arith.addf %53, %54 : vector<64x128xf32>
    %c0_45 = arith.constant 0 : index
    %c0_46 = arith.constant 0 : index
    %56 = vector.load %arg8[%c0_45, %c0_46] : memref<64x128xf32, #tpu.memory_space<vmem>>, vector<64x128xf32>
    tpu.vector_store %arg8[%c0_45, %c0_46], %55 {strides = array<i32>} : memref<64x128xf32, #tpu.memory_space<vmem>>, vector<64x128xf32>,
    return
  }
  func.func @transform_0(%arg0: i32) -> (i32, i32) {
    %c0_i32 = arith.constant 0 : i32
    %c0_i32_0 = arith.constant 0 : i32
    return %arg0, %c0_i32 : i32, i32
  }
  func.func @transform_1(%arg0: i32) -> (i32, i32) {
    %c0_i32 = arith.constant 0 : i32
    %c0_i32_0 = arith.constant 0 : i32
    %c0_i32_1 = arith.constant 0 : i32
    return %c0_i32, %c0_i32_0 : i32, i32
  }
  func.func @transform_2(%arg0: i32) -> (i32, i32) {
    %c0_i32 = arith.constant 0 : i32
    %c0_i32_0 = arith.constant 0 : i32
    %c0_i32_1 = arith.constant 0 : i32
    return %c0_i32, %c0_i32_0 : i32, i32
  }
  func.func @transform_3(%arg0: i32) -> (i32, i32) {
    %c0_i32 = arith.constant 0 : i32
    %c0_i32_0 = arith.constant 0 : i32
    %c0_i32_1 = arith.constant 0 : i32
    return %c0_i32, %c0_i32_0 : i32, i32
  }
  func.func @transform_4(%arg0: i32) -> (i32, i32) {
    %c0_i32 = arith.constant 0 : i32
    %c0_i32_0 = arith.constant 0 : i32
    %c0_i32_1 = arith.constant 0 : i32
    return %c0_i32, %c0_i32_0 : i32, i32
  }
  func.func @transform_5(%arg0: i32) -> (i32, i32) {
    %c0_i32 = arith.constant 0 : i32
    %c0_i32_0 = arith.constant 0 : i32
    %c0_i32_1 = arith.constant 0 : i32
    return %c0_i32, %c0_i32_0 : i32, i32
  }
  func.func @transform_6(%arg0: i32) -> (i32, i32) {
    %c0_i32 = arith.constant 0 : i32
    %c0_i32_0 = arith.constant 0 : i32
    %c0_i32_1 = arith.constant 0 : i32
    return %c0_i32, %c0_i32_0 : i32, i32
  }
  func.func @transform_7(%arg0: i32) -> (i32, i32) {
    %c0_i32 = arith.constant 0 : i32
    %c0_i32_0 = arith.constant 0 : i32
    return %arg0, %c0_i32 : i32, i32
  }
}

</mosaic_0001>

<llo_original>
// kernel: tpu_custom_call.1
$region0: #{tpu_custom_call.1}
  #allocation0 [shape = 'u32[]', space=smem, size = 0x4, offset = 0x4, fixed_abs, tag = 'smem constant byte address 0x4 - core index']
  #allocation1 [shape = 'u32[144,128]{1,0:T(1,128)}', space=vmem, size = 0x12000, scoped, tag = 'internal scratch']
  #allocation2 [shape = 'f32[96,256]{1,0:T(8,128)}', space=vmem, size = 0x18000, scoped, tag = 'scratch operand']
  %s0 = inlined_call_operand.vmem [shape: f32[448,16], index: 0, kind: input, shape index: {}]
  %s1 = inlined_call_operand.vmem [shape: bf16[48,256], index: 1, kind: input, shape index: {}]
  %s2 = inlined_call_operand.vmem [shape: f32[1,256], index: 2, kind: input, shape index: {}]
  %s3 = inlined_call_operand.hbm [shape: bf16[768,256], index: 3, kind: input, shape index: {}]
  %s4 = inlined_call_operand.vmem [shape: f32[1,256], index: 4, kind: input, shape index: {}]
  %s5 = inlined_call_operand.vmem [shape: bf16[256,128], index: 5, kind: input, shape index: {}]
  %s6 = inlined_call_operand.vmem [shape: f32[64,128], index: 6, kind: input, shape index: {}]
  %s7 = inlined_call_operand.hbm [shape: f32[128,128], index: 7, kind: output, shape index: {}]
  %s8 = sld [smem:[#allocation0]]
  $region65: #{tpu_custom_call.1} parent=0
    _
  %s10 = ssub.s32 1, %s8
  %s11 = scalar_select 0, %s10, %s8
  $region1: #{tpu_custom_call.1} parent=0
    #allocation3 [shape = 'u8[393216]{0}', space=vmem, size = 0x60000, scoped, tag = 'input window, operand 3, single buffered']
    #allocation4 [shape = 's32[2]{0}', space=sflag, size = 0x8, scoped, tag = 'scoped memory for tpu_custom_call.1']
    #allocation5 [shape = 's32[2]{0}', space=sflag, size = 0x8, scoped, tag = 'scoped memory for tpu_custom_call.1']
    #allocation6 [shape = 'u8[65536]{0}', space=vmem, size = 0x10000, scoped, tag = 'output window, operand 0']
    %12 = vsyncpa [#allocation4], 0
    %13 = vsyncpa [#allocation5], 0
    %s14 = scalar_lea.sflag [#allocation5], 1
    %15 = vsyncpa %s14, 0
    loop: start=0, step=1, limit=4
    $region2: #{tpu_custom_call.1} parent=1 // loop_pre_header
      _
    $region3: #{tpu_custom_call.1} parent=1 // loop_header
      %s17 = sphi 0, %s21
      %p18 = scmp.ge.s32.totalorder %s17, 4
      %s27 = sphi 0, %s29
      %s30 = sphi 0, %s27
      %s31 = sphi 0, %s30
      %s47 = sphi 0, %s31
      %s51 = sphi 0, %s51
      %s53 = sphi 0, %s51
      %s54 = sphi 0, %s53
      %s68 = sphi 0, %s54
      %s72 = sphi 0, %s72
      %s74 = sphi 0, %s72
      %s75 = sphi 0, %s74
      %s89 = sphi 0, %s75
      %s93 = sphi 0, %s93
      %s95 = sphi 0, %s93
      %s96 = sphi 0, %s95
      %s110 = sphi 0, %s96
      %s114 = sphi 0, %s114
      %s116 = sphi 0, %s114
      %s117 = sphi 0, %s116
      %s131 = sphi 0, %s117
      %s135 = sphi 0, %s135
      %s137 = sphi 0, %s135
      %s138 = sphi 0, %s137
      %s152 = sphi 0, %s138
      %s156 = sphi 0, %s156
      %s158 = sphi 0, %s156
      %s159 = sphi 0, %s158
      %s173 = sphi 0, %s159
      %s179 = sphi 0, %s181
      %s182 = sphi 0, %s179
      %s183 = sphi 0, %s182
      %s199 = sphi 0, %s183
    $region4: #{tpu_custom_call.1} parent=1 // loop_header_branch
      %20 = sbr.rel (%p18) target = $region8
    $region5: #{tpu_custom_call.1} parent=1 // loop_body
      %s22 = ssub.s32 %s17, 1
      %s23 = ssub.s32 %s17, 2
      %s24 = sadd.s32 %s17, 1
      %s25 = ssub.s32 %s17, %s24
      %p26 = scmp.eq.s32.totalorder %s25, 0
      %s28 = sadd.s32 %s27, 1
      %s29 = scalar_select %p26, %s27, %s28
      %p32 = pneg %p26
      %p33 = scmp.eq.s32.totalorder %s17, 1
      %p34 = por %p32, %p33
      %p35 = scmp.ne.s32.totalorder %s27, %s30
      %p36 = scmp.eq.s32.totalorder %s17, 0
      %p37 = por %p35, %p36
      %p38 = scmp.ne.s32.totalorder %s27, %s30
      %p39 = scmp.eq.s32.totalorder %s22, 1
      %p40 = por %p38, %p39
      %p41 = scmp.ne.s32.totalorder %s30, %s31
      %p42 = scmp.eq.s32.totalorder %s22, 0
      %p43 = por %p41, %p42
      %p44 = scmp.ne.s32.totalorder %s30, %s31
      %p45 = scmp.eq.s32.totalorder %s23, 1
      %p46 = por %p44, %p45
      %p48 = scmp.ne.s32.totalorder %s31, %s47
      %p49 = scmp.eq.s32.totalorder %s23, 0
      %p50 = por %p48, %p49
      %s52 = sadd.s32 %s51, 1
      %p55 = scmp.eq.s32.totalorder %s17, 1
      %p56 = scmp.ne.s32.totalorder %s51, %s53
      %p57 = scmp.eq.s32.totalorder %s17, 0
      %p58 = por %p56, %p57
      %p59 = scmp.ne.s32.totalorder %s51, %s53
      %p60 = scmp.eq.s32.totalorder %s22, 1
      %p61 = por %p59, %p60
      %p62 = scmp.ne.s32.totalorder %s53, %s54
      %p63 = scmp.eq.s32.totalorder %s22, 0
      %p64 = por %p62, %p63
      %p65 = scmp.ne.s32.totalorder %s53, %s54
      %p66 = scmp.eq.s32.totalorder %s23, 1
      %p67 = por %p65, %p66
      %p69 = scmp.ne.s32.totalorder %s54, %s68
      %p70 = scmp.eq.s32.totalorder %s23, 0
      %p71 = por %p69, %p70
      %s73 = sadd.s32 %s72, 1
      %p76 = scmp.eq.s32.totalorder %s17, 1
      %p77 = scmp.ne.s32.totalorder %s72, %s74
      %p78 = scmp.eq.s32.totalorder %s17, 0
      %p79 = por %p77, %p78
      %p80 = scmp.ne.s32.totalorder %s72, %s74
      %p81 = scmp.eq.s32.totalorder %s22, 1
      %p82 = por %p80, %p81
      %p83 = scmp.ne.s32.totalorder %s74, %s75
      %p84 = scmp.eq.s32.totalorder %s22, 0
      %p85 = por %p83, %p84
      %p86 = scmp.ne.s32.totalorder %s74, %s75
      %p87 = scmp.eq.s32.totalorder %s23, 1
      %p88 = por %p86, %p87
      %p90 = scmp.ne.s32.totalorder %s75, %s89
      %p91 = scmp.eq.s32.totalorder %s23, 0
      %p92 = por %p90, %p91
      %s94 = sadd.s32 %s93, 1
      %p97 = scmp.eq.s32.totalorder %s17, 1
      %p98 = scmp.ne.s32.totalorder %s93, %s95
      %p99 = scmp.eq.s32.totalorder %s17, 0
      %p100 = por %p98, %p99
      %p101 = scmp.ne.s32.totalorder %s93, %s95
      %p102 = scmp.eq.s32.totalorder %s22, 1
      %p103 = por %p101, %p102
      %p104 = scmp.ne.s32.totalorder %s95, %s96
      %p105 = scmp.eq.s32.totalorder %s22, 0
      %p106 = por %p104, %p105
      %p107 = scmp.ne.s32.totalorder %s95, %s96
      %p108 = scmp.eq.s32.totalorder %s23, 1
      %p109 = por %p107, %p108
      %p111 = scmp.ne.s32.totalorder %s96, %s110
      %p112 = scmp.eq.s32.totalorder %s23, 0
      %p113 = por %p111, %p112
      %s115 = sadd.s32 %s114, 1
      %p118 = scmp.eq.s32.totalorder %s17, 1
      %p119 = scmp.ne.s32.totalorder %s114, %s116
      %p120 = scmp.eq.s32.totalorder %s17, 0
      %p121 = por %p119, %p120
      %p122 = scmp.ne.s32.totalorder %s114, %s116
      %p123 = scmp.eq.s32.totalorder %s22, 1
      %p124 = por %p122, %p123
      %p125 = scmp.ne.s32.totalorder %s116, %s117
      %p126 = scmp.eq.s32.totalorder %s22, 0
      %p127 = por %p125, %p126
      %p128 = scmp.ne.s32.totalorder %s116, %s117
      %p129 = scmp.eq.s32.totalorder %s23, 1
      %p130 = por %p128, %p129
      %p132 = scmp.ne.s32.totalorder %s117, %s131
      %p133 = scmp.eq.s32.totalorder %s23, 0
      %p134 = por %p132, %p133
      %s136 = sadd.s32 %s135, 1
      %p139 = scmp.eq.s32.totalorder %s17, 1
      %p140 = scmp.ne.s32.totalorder %s135, %s137
      %p141 = scmp.eq.s32.totalorder %s17, 0
      %p142 = por %p140, %p141
      %p143 = scmp.ne.s32.totalorder %s135, %s137
      %p144 = scmp.eq.s32.totalorder %s22, 1
      %p145 = por %p143, %p144
      %p146 = scmp.ne.s32.totalorder %s137, %s138
      %p147 = scmp.eq.s32.totalorder %s22, 0
      %p148 = por %p146, %p147
      %p149 = scmp.ne.s32.totalorder %s137, %s138
      %p150 = scmp.eq.s32.totalorder %s23, 1
      %p151 = por %p149, %p150
      %p153 = scmp.ne.s32.totalorder %s138, %s152
      %p154 = scmp.eq.s32.totalorder %s23, 0
      %p155 = por %p153, %p154
      %s157 = sadd.s32 %s156, 1
      %p160 = scmp.eq.s32.totalorder %s17, 1
      %p161 = scmp.ne.s32.totalorder %s156, %s158
      %p162 = scmp.eq.s32.totalorder %s17, 0
      %p163 = por %p161, %p162
      %p164 = scmp.ne.s32.totalorder %s156, %s158
      %p165 = scmp.eq.s32.totalorder %s22, 1
      %p166 = por %p164, %p165
      %p167 = scmp.ne.s32.totalorder %s158, %s159
      %p168 = scmp.eq.s32.totalorder %s22, 0
      %p169 = por %p167, %p168
      %p170 = scmp.ne.s32.totalorder %s158, %s159
      %p171 = scmp.eq.s32.totalorder %s23, 1
      %p172 = por %p170, %p171
      %p174 = scmp.ne.s32.totalorder %s159, %s173
      %p175 = scmp.eq.s32.totalorder %s23, 0
      %p176 = por %p174, %p175
      %s177 = ssub.s32 %s17, %s24
      %p178 = scmp.eq.s32.totalorder %s177, 0
      %s180 = sadd.s32 %s179, 1
      %s181 = scalar_select %p178, %s179, %s180
      %p184 = pneg %p178
      %p185 = scmp.eq.s32.totalorder %s17, 1
      %p186 = por %p184, %p185
      %p187 = scmp.ne.s32.totalorder %s179, %s182
      %p188 = scmp.eq.s32.totalorder %s17, 0
      %p189 = por %p187, %p188
      %p190 = scmp.ne.s32.totalorder %s179, %s182
      %p191 = scmp.eq.s32.totalorder %s22, 1
      %p192 = por %p190, %p191
      %p193 = scmp.ne.s32.totalorder %s182, %s183
      %p194 = scmp.eq.s32.totalorder %s22, 0
      %p195 = por %p193, %p194
      %p196 = scmp.ne.s32.totalorder %s182, %s183
      %p197 = scmp.eq.s32.totalorder %s23, 1
      %p198 = por %p196, %p197
      %p200 = scmp.ne.s32.totalorder %s183, %s199
      %p201 = scmp.eq.s32.totalorder %s23, 0
      %p202 = por %p200, %p201
      %p203 = scmp.le.s32.totalorder 1, %s17
      %p204 = scmp.lt.s32.totalorder %s17, 3
      %p205 = pnand %p203, %p204
      %p206 = pneg %p205
      // Predicated region
      $region9: #{tpu_custom_call.1} parent=5 // pred_check
        _
      $region10: #{tpu_custom_call.1} parent=5 // pred_check_branch
        %208 = sbr.rel (%p205) target = $region12
      $region11: #{tpu_custom_call.1} parent=5 // pred_region
        %s209 = ssub.s32 %s17, 1
        // Predicated region
        $region13: #{tpu_custom_call.1} parent=11 // pred_check
          %p210 = pneg %p64
        $region14: #{tpu_custom_call.1} parent=11 // pred_check_branch
          %212 = sbr.rel (%p210) target = $region16
        $region15: #{tpu_custom_call.1} parent=11 // pred_region
          _
        $region16: #{tpu_custom_call.1} parent=11 // pred_fallthru
          _
        // Predicated region
        $region17: #{tpu_custom_call.1} parent=11 // pred_check
          %p213 = pneg %p85
        $region18: #{tpu_custom_call.1} parent=11 // pred_check_branch
          %215 = sbr.rel (%p213) target = $region20
        $region19: #{tpu_custom_call.1} parent=11 // pred_region
          _
        $region20: #{tpu_custom_call.1} parent=11 // pred_fallthru
          _
        // Predicated region
        $region21: #{tpu_custom_call.1} parent=11 // pred_check
          %p216 = pneg %p106
        $region22: #{tpu_custom_call.1} parent=11 // pred_check_branch
          %218 = sbr.rel (%p216) target = $region24
        $region23: #{tpu_custom_call.1} parent=11 // pred_region
          %s220 = ssub.s32 12288, 12288
          %221 = vsyncadd [#allocation4], %s220
          %s222 = sshll.u32 [#allocation3], 4
          %s223 = int_to_ptr.vmem [resolvable:$true] %s222
          %228 = dma.hbm_to_vmem [thread:$0]  %s3, 12288, %s223, [#allocation4], 128, 128, 8
        $region24: #{tpu_custom_call.1} parent=11 // pred_fallthru
          _
        // Predicated region
        $region25: #{tpu_custom_call.1} parent=11 // pred_check
          %p229 = pneg %p127
        $region26: #{tpu_custom_call.1} parent=11 // pred_check_branch
          %231 = sbr.rel (%p229) target = $region28
        $region27: #{tpu_custom_call.1} parent=11 // pred_region
          _
        $region28: #{tpu_custom_call.1} parent=11 // pred_fallthru
          _
        // Predicated region
        $region29: #{tpu_custom_call.1} parent=11 // pred_check
          %p232 = pneg %p148
        $region30: #{tpu_custom_call.1} parent=11 // pred_check_branch
          %234 = sbr.rel (%p232) target = $region32
        $region31: #{tpu_custom_call.1} parent=11 // pred_region
          _
        $region32: #{tpu_custom_call.1} parent=11 // pred_fallthru
          _
        // Predicated region
        $region33: #{tpu_custom_call.1} parent=11 // pred_check
          %p235 = pneg %p169
        $region34: #{tpu_custom_call.1} parent=11 // pred_check_branch
          %237 = sbr.rel (%p235) target = $region36
        $region35: #{tpu_custom_call.1} parent=11 // pred_region
          _
        $region36: #{tpu_custom_call.1} parent=11 // pred_fallthru
          _
      $region12: #{tpu_custom_call.1} parent=5 // pred_fallthru
        _
      %p238 = scmp.lt.s32.totalorder %s17, 2
      // Predicated region
      $region37: #{tpu_custom_call.1} parent=5 // pred_check
        %p239 = pneg %p238
      $region38: #{tpu_custom_call.1} parent=5 // pred_check_branch
        %241 = sbr.rel (%p239) target = $region40
      $region39: #{tpu_custom_call.1} parent=5 // pred_region
        // Predicated region
        $region41: #{tpu_custom_call.1} parent=39 // pred_check
          %p242 = pneg %p37
        $region42: #{tpu_custom_call.1} parent=39 // pred_check_branch
          %244 = sbr.rel (%p242) target = $region44
        $region43: #{tpu_custom_call.1} parent=39 // pred_region
          %s245 = smul.u32 28, %s17
          %p246 = scmp.lt.s32.totalorder %s245, 55
          %s247 = scalar_select %p246, %s245, 55
          %s248 = smul.addr %s247, 8
          %s249 = scalar_lea.vmem %s0, %s248
          %s250 = smul.u32 28, %s17
        $region44: #{tpu_custom_call.1} parent=39 // pred_fallthru
          _
      $region40: #{tpu_custom_call.1} parent=5 // pred_fallthru
        _
      %p251 = scmp.le.s32.totalorder 1, %s17
      %p252 = scmp.lt.s32.totalorder %s17, 3
      %p253 = pnand %p251, %p252
      %p254 = pneg %p253
      // Predicated region
      $region45: #{tpu_custom_call.1} parent=5 // pred_check
        _
      $region46: #{tpu_custom_call.1} parent=5 // pred_check_branch
        %256 = sbr.rel (%p253) target = $region48
      $region47: #{tpu_custom_call.1} parent=5 // pred_region
        %s257 = ssub.s32 %s17, 1
        // Predicated region
        $region49: #{tpu_custom_call.1} parent=47 // pred_check
          %p258 = pneg %p106
        $region50: #{tpu_custom_call.1} parent=47 // pred_check_branch
          %260 = sbr.rel (%p258) target = $region52
        $region51: #{tpu_custom_call.1} parent=47 // pred_region
          %261 = dma.done [#allocation4], 12288
        $region52: #{tpu_custom_call.1} parent=47 // pred_fallthru
          _
        %s262 = smul.u32 28, %s22
        %p263 = scmp.lt.s32.totalorder %s262, 55
        %s264 = scalar_select %p263, %s262, 55
        %s265 = smul.addr %s264, 8
        %s266 = scalar_lea.vmem %s0, %s265
        %p267 = pneg %p43
        %p268 = pneg %p40
        %p269 = pneg %p64
        %p270 = pneg %p61
        %p271 = pneg %p85
        %p272 = pneg %p82
        %p273 = pneg %p106
        %p274 = pneg %p103
        %p275 = pneg %p127
        %p276 = pneg %p124
        %p277 = pneg %p148
        %p278 = pneg %p145
        %p279 = pneg %p169
        %p280 = pneg %p166
        %p281 = pneg %p195
        %p282 = pneg %p192
        %s283 = sand.u32 %s182, 1
        %s284 = scalar_lea.sflag [#allocation5], %s283
        %s285 = sand.u32 %s182, 1
        %s286 = smul.addr %s285, 64
        %s287 = scalar_lea.vmem [#allocation6], %s286
        %s288 = smul.u32 28, %s22
        %p289 = scmp.lt.s32.totalorder %s288, 55
        %s290 = scalar_select %p289, %s288, 55
        %s291 = smul.addr %s290, 8
        %s292 = scalar_lea.vmem %s0, %s291
        %s293 = smul.u32 28, %s22
        %s294 = smul.u32 8, %s22
        %v296 = vld [vmem:[%s292] ss:$2 sm:$0xff]
        %s297 = scalar_lea.vmem %s292, 16
        %v298 = vld [vmem:[%s297] ss:$2 sm:$0xff]
        %s299 = scalar_lea.vmem %s292, 32
        %v300 = vld [vmem:[%s299] ss:$2 sm:$0xff]
        %s301 = scalar_lea.vmem %s292, 1
        %v302 = vld [vmem:[%s301] ss:$2 sm:$0xff]
        %s303 = scalar_lea.vmem %s292, 17
        %v304 = vld [vmem:[%s303] ss:$2 sm:$0xff]
        %s305 = scalar_lea.vmem %s292, 33
        %v306 = vld [vmem:[%s305] ss:$2 sm:$0xff]
        %s307 = scalar_lea.vmem %s292, 2
        %v308 = vld [vmem:[%s307] ss:$2 sm:$0xff]
        %s309 = scalar_lea.vmem %s292, 18
        %v310 = vld [vmem:[%s309] ss:$2 sm:$0xff]
        %s311 = scalar_lea.vmem %s292, 34
        %v312 = vld [vmem:[%s311] ss:$2 sm:$0xff]
        %316 = vrot.lane.b32.xlu0 %v302, 16
        %v317 = vpop.permute.xlu0 %316
        %318 = vrot.lane.b32.xlu0 %v304, 16
        %v319 = vpop.permute.xlu0 %318
        %320 = vrot.lane.b32.xlu0 %v306, 16
        %v321 = vpop.permute.xlu0 %320
        %328 = vrot.lane.b32.xlu0 %v308, 32
        %v329 = vpop.permute.xlu0 %328
        %330 = vrot.lane.b32.xlu0 %v310, 32
        %v331 = vpop.permute.xlu0 %330
        %332 = vrot.lane.b32.xlu0 %v312, 32
        %v333 = vpop.permute.xlu0 %332
        %vm337 = vcmask 130048
        %v338 = vsel %vm337, %v296, %v317
        %v339 = vsel %vm337, %v298, %v319
        %v340 = vsel %vm337, %v300, %v321
        %vm341 = vcmask 261120
        %v342 = vsel %vm341, %v338, %v329
        %v343 = vsel %vm341, %v339, %v331
        %v344 = vsel %vm341, %v340, %v333
        %s345 = scalar_lea.vmem %s292, 56
        %v346 = vld [vmem:[%s345] ss:$2 sm:$0xff]
        %s347 = scalar_lea.vmem %s292, 72
        %v348 = vld [vmem:[%s347] ss:$2 sm:$0xff]
        %s349 = scalar_lea.vmem %s292, 88
        %v350 = vld [vmem:[%s349] ss:$2 sm:$0xff]
        %s351 = scalar_lea.vmem %s292, 57
        %v352 = vld [vmem:[%s351] ss:$2 sm:$0xff]
        %s353 = scalar_lea.vmem %s292, 73
        %v354 = vld [vmem:[%s353] ss:$2 sm:$0xff]
        %s355 = scalar_lea.vmem %s292, 89
        %v356 = vld [vmem:[%s355] ss:$2 sm:$0xff]
        %s357 = scalar_lea.vmem %s292, 58
        %v358 = vld [vmem:[%s357] ss:$2 sm:$0xff]
        %s359 = scalar_lea.vmem %s292, 74
        %v360 = vld [vmem:[%s359] ss:$2 sm:$0xff]
        %s361 = scalar_lea.vmem %s292, 90
        %v362 = vld [vmem:[%s361] ss:$2 sm:$0xff]
        %366 = vrot.lane.b32.xlu0 %v352, 16
        %v367 = vpop.permute.xlu0 %366
        %368 = vrot.lane.b32.xlu0 %v354, 16
        %v369 = vpop.permute.xlu0 %368
        %370 = vrot.lane.b32.xlu0 %v356, 16
        %v371 = vpop.permute.xlu0 %370
        %378 = vrot.lane.b32.xlu0 %v358, 32
        %v379 = vpop.permute.xlu0 %378
        %380 = vrot.lane.b32.xlu0 %v360, 32
        %v381 = vpop.permute.xlu0 %380
        %382 = vrot.lane.b32.xlu0 %v362, 32
        %v383 = vpop.permute.xlu0 %382
        %v387 = vsel %vm337, %v346, %v367
        %v388 = vsel %vm337, %v348, %v369
        %v389 = vsel %vm337, %v350, %v371
        %v390 = vsel %vm341, %v387, %v379
        %v391 = vsel %vm341, %v388, %v381
        %v392 = vsel %vm341, %v389, %v383
        %s393 = scalar_lea.vmem %s292, 112
        %v394 = vld [vmem:[%s393] ss:$2 sm:$0xff]
        %s395 = scalar_lea.vmem %s292, 128
        %v396 = vld [vmem:[%s395] ss:$2 sm:$0xff]
        %s397 = scalar_lea.vmem %s292, 144
        %v398 = vld [vmem:[%s397] ss:$2 sm:$0xff]
        %s399 = scalar_lea.vmem %s292, 113
        %v400 = vld [vmem:[%s399] ss:$2 sm:$0xff]
        %s401 = scalar_lea.vmem %s292, 129
        %v402 = vld [vmem:[%s401] ss:$2 sm:$0xff]
        %s403 = scalar_lea.vmem %s292, 145
        %v404 = vld [vmem:[%s403] ss:$2 sm:$0xff]
        %s405 = scalar_lea.vmem %s292, 114
        %v406 = vld [vmem:[%s405] ss:$2 sm:$0xff]
        %s407 = scalar_lea.vmem %s292, 130
        %v408 = vld [vmem:[%s407] ss:$2 sm:$0xff]
        %s409 = scalar_lea.vmem %s292, 146
        %v410 = vld [vmem:[%s409] ss:$2 sm:$0xff]
        %414 = vrot.lane.b32.xlu0 %v400, 16
        %v415 = vpop.permute.xlu0 %414
        %416 = vrot.lane.b32.xlu0 %v402, 16
        %v417 = vpop.permute.xlu0 %416
        %418 = vrot.lane.b32.xlu0 %v404, 16
        %v419 = vpop.permute.xlu0 %418
        %426 = vrot.lane.b32.xlu0 %v406, 32
        %v427 = vpop.permute.xlu0 %426
        %428 = vrot.lane.b32.xlu0 %v408, 32
        %v429 = vpop.permute.xlu0 %428
        %430 = vrot.lane.b32.xlu0 %v410, 32
        %v431 = vpop.permute.xlu0 %430
        %v435 = vsel %vm337, %v394, %v415
        %v436 = vsel %vm337, %v396, %v417
        %v437 = vsel %vm337, %v398, %v419
        %v438 = vsel %vm341, %v435, %v427
        %v439 = vsel %vm341, %v436, %v429
        %v440 = vsel %vm341, %v437, %v431
        %s441 = scalar_lea.vmem %s292, 168
        %v442 = vld [vmem:[%s441] ss:$2 sm:$0xff]
        %s443 = scalar_lea.vmem %s292, 184
        %v444 = vld [vmem:[%s443] ss:$2 sm:$0xff]
        %s445 = scalar_lea.vmem %s292, 200
        %v446 = vld [vmem:[%s445] ss:$2 sm:$0xff]
        %s447 = scalar_lea.vmem %s292, 169
        %v448 = vld [vmem:[%s447] ss:$2 sm:$0xff]
        %s449 = scalar_lea.vmem %s292, 185
        %v450 = vld [vmem:[%s449] ss:$2 sm:$0xff]
        %s451 = scalar_lea.vmem %s292, 201
        %v452 = vld [vmem:[%s451] ss:$2 sm:$0xff]
        %s453 = scalar_lea.vmem %s292, 170
        %v454 = vld [vmem:[%s453] ss:$2 sm:$0xff]
        %s455 = scalar_lea.vmem %s292, 186
        %v456 = vld [vmem:[%s455] ss:$2 sm:$0xff]
        %s457 = scalar_lea.vmem %s292, 202
        %v458 = vld [vmem:[%s457] ss:$2 sm:$0xff]
        %462 = vrot.lane.b32.xlu0 %v448, 16
        %v463 = vpop.permute.xlu0 %462
        %464 = vrot.lane.b32.xlu0 %v450, 16
        %v465 = vpop.permute.xlu0 %464
        %466 = vrot.lane.b32.xlu0 %v452, 16
        %v467 = vpop.permute.xlu0 %466
        %474 = vrot.lane.b32.xlu0 %v454, 32
        %v475 = vpop.permute.xlu0 %474
        %476 = vrot.lane.b32.xlu0 %v456, 32
        %v477 = vpop.permute.xlu0 %476
        %478 = vrot.lane.b32.xlu0 %v458, 32
        %v479 = vpop.permute.xlu0 %478
        %v483 = vsel %vm337, %v442, %v463
        %v484 = vsel %vm337, %v444, %v465
        %v485 = vsel %vm337, %v446, %v467
        %v486 = vsel %vm341, %v483, %v475
        %v487 = vsel %vm341, %v484, %v477
        %v488 = vsel %vm341, %v485, %v479
        %v489 = vpack.c.bf16 %v343, %v342
        %v490 = vpack.c.bf16 %v390, %v344
        %v491 = vpack.c.bf16 %v392, %v391
        %v492 = vpack.c.bf16 %v439, %v438
        %v493 = vpack.c.bf16 %v486, %v440
        %v494 = vpack.c.bf16 %v488, %v487
        %v495 = vld [vmem:[%s1] sm:$0xff]
        %v496 = vld [vmem:[%s1 + $0x8] sm:$0xff]
        %v497 = vld [vmem:[%s1 + $0x10] sm:$0xff]
        %v498 = vld [vmem:[%s1 + $0x18] sm:$0xff]
        %v499 = vld [vmem:[%s1 + $0x20] sm:$0xff]
        %v500 = vld [vmem:[%s1 + $0x28] sm:$0xff]
        %v501 = vld [vmem:[%s2] sm:$0x3]
        %v503 = vlaneseq
        %v504 = vshrl.u32 %v503, 7
        %v505 = vsub.s32 0, %v504
        %v506 = vrot.slane %v501, %v505
        %v507 = vlaneseq
        %v508 = vshrl.u32 %v507, 7
        %v509 = vsub.s32 1, %v508
        %v510 = vrot.slane %v501, %v509
        %v519 = vunpack.c.l.b16 %v495
        %v520 = vunpack.c.h.b16 %v495
        %v521 = vunpack.c.l.b16 %v496
        %v522 = vunpack.c.h.b16 %v496
        %v523 = vunpack.c.l.b16 %v497
        %v524 = vunpack.c.h.b16 %v497
        %v525 = vunpack.c.l.b16 %v498
        %v526 = vunpack.c.h.b16 %v498
        %v527 = vunpack.c.l.b16 %v499
        %v528 = vunpack.c.h.b16 %v499
        %v529 = vunpack.c.l.b16 %v500
        %v530 = vunpack.c.h.b16 %v500
        %v531 = vpack.c.b16 %v521, %v519
        %v532 = vpack.c.b16 %v522, %v520
        %v533 = vpack.c.b16 %v525, %v523
        %v534 = vpack.c.b16 %v526, %v524
        %v535 = vpack.c.b16 %v529, %v527
        %v536 = vpack.c.b16 %v530, %v528
        %vm543 = vcmask 392192
        %v545 = vsel %vm543, %v489, 0
        %v548 = vsel %vm543, %v490, 0
        %v551 = vsel %vm543, %v491, 0
        %v554 = vsel %vm543, %v492, 0
        %v557 = vsel %vm543, %v493, 0
        %v560 = vsel %vm543, %v494, 0
        %562 = vmatprep.subr.bf16.mxu0 0
        %563 = vmatpush1.bf16.msra.mxu0 0
        %564 = vmatprep.subr.bf16.mxu0 0
        %565 = vmatpush1.bf16.msra.mxu0 0
        %566 = vmatprep.subr.bf16.mxu0 0
        %567 = vmatpush1.bf16.msra.mxu0 0
        %568 = vmatprep.subr.bf16.mxu0 0
        %569 = vmatpush1.bf16.msra.mxu0 0
        %570 = vmatprep.subr.bf16.mxu0 0
        %571 = vmatpush1.bf16.msra.mxu0 0
        %572 = vmatprep.subr.bf16.mxu0 %v536
        %573 = vmatpush1.bf16.msra.mxu0 %v535
        %574 = vmatprep.subr.bf16.mxu0 %v534
        %575 = vmatpush1.bf16.msra.mxu0 %v533
        %576 = vmatprep.subr.bf16.mxu0 %v532
        %577 = vmatpush1.bf16.msra.mxu0 %v531
        %578 = vmatprep.subr.bf16.mxu0 0
        %579 = vmatpush2.bf16.msra.mxu0 0
        %580 = vmatprep.subr.bf16.mxu0 0
        %581 = vmatpush2.bf16.msra.mxu0 0
        %582 = vmatprep.subr.bf16.mxu0 0
        %583 = vmatpush2.bf16.msra.mxu0 0
        %584 = vmatprep.subr.bf16.mxu0 0
        %585 = vmatpush2.bf16.msra.mxu0 0
        %586 = vmatprep.subr.bf16.mxu0 0
        %587 = vmatpush2.bf16.msra.mxu0 0
        %588 = vmatprep.subr.bf16.mxu0 0
        %589 = vmatpush2.bf16.msra.mxu0 0
        %590 = vmatprep.subr.bf16.mxu0 0
        %591 = vmatpush2.bf16.msra.mxu0 0
        %592 = vmatprep.subr.bf16.mxu0 0
        %593 = vmatpush2.bf16.msra.mxu0 0
        %594 = vmatprep.mubr.bf16.mxu0 0
        %595 = vmatmul.mubr.bf16.gmra.mxu0 %v545
        %v596 = vpop.f32.mrf.mxu0
        %v597 = vadd.f32 %v506, %v596
        %v598 = vpop.f32.mrf.mxu0
        %v599 = vadd.f32 %v510, %v598
        %v600 = vpop.f32.mrf.mxu0
        %v601 = vadd.f32 %v506, %v600
        %v602 = vpop.f32.mrf.mxu0
        %v603 = vadd.f32 %v510, %v602
        %604 = vmatprep.mubr.bf16.mxu0 0
        %605 = vmatmul.mubr.bf16.gmra.mxu0 %v548
        %v606 = vpop.f32.mrf.mxu0
        %v607 = vadd.f32 %v506, %v606
        %v608 = vpop.f32.mrf.mxu0
        %v609 = vadd.f32 %v510, %v608
        %v610 = vpop.f32.mrf.mxu0
        %v611 = vadd.f32 %v506, %v610
        %v612 = vpop.f32.mrf.mxu0
        %v613 = vadd.f32 %v510, %v612
        %614 = vmatprep.mubr.bf16.mxu0 0
        %615 = vmatmul.mubr.bf16.gmra.mxu0 %v551
        %v616 = vpop.f32.mrf.mxu0
        %v617 = vadd.f32 %v506, %v616
        %v618 = vpop.f32.mrf.mxu0
        %v619 = vadd.f32 %v510, %v618
        %v620 = vpop.f32.mrf.mxu0
        %v621 = vadd.f32 %v506, %v620
        %v622 = vpop.f32.mrf.mxu0
        %v623 = vadd.f32 %v510, %v622
        %624 = vmatprep.mubr.bf16.mxu0 0
        %625 = vmatmul.mubr.bf16.gmra.mxu0 %v554
        %v626 = vpop.f32.mrf.mxu0
        %v627 = vadd.f32 %v506, %v626
        %v628 = vpop.f32.mrf.mxu0
        %v629 = vadd.f32 %v510, %v628
        %v630 = vpop.f32.mrf.mxu0
        %v631 = vadd.f32 %v506, %v630
        %v632 = vpop.f32.mrf.mxu0
        %v633 = vadd.f32 %v510, %v632
        %634 = vmatprep.mubr.bf16.mxu0 0
        %635 = vmatmul.mubr.bf16.gmra.mxu0 %v557
        %v636 = vpop.f32.mrf.mxu0
        %v637 = vadd.f32 %v506, %v636
        %v638 = vpop.f32.mrf.mxu0
        %v639 = vadd.f32 %v510, %v638
        %v640 = vpop.f32.mrf.mxu0
        %v641 = vadd.f32 %v506, %v640
        %v642 = vpop.f32.mrf.mxu0
        %v643 = vadd.f32 %v510, %v642
        %644 = vmatprep.mubr.bf16.mxu0 0
        %645 = vmatmul.mubr.bf16.gmra.mxu0 %v560
        %v646 = vpop.f32.mrf.mxu0
        %v647 = vadd.f32 %v506, %v646
        %v648 = vpop.f32.mrf.mxu0
        %v649 = vadd.f32 %v510, %v648
        %v650 = vpop.f32.mrf.mxu0
        %v651 = vadd.f32 %v506, %v650
        %v652 = vpop.f32.mrf.mxu0
        %v653 = vadd.f32 %v510, %v652
        %654 = vdwg.mxu0
        %v655 = vmax.f32 %v597, 0.0
        %v656 = vmax.f32 %v599, 0.0
        %v657 = vmax.f32 %v601, 0.0
        %v658 = vmax.f32 %v603, 0.0
        %v659 = vmax.f32 %v607, 0.0
        %v660 = vmax.f32 %v609, 0.0
        %v661 = vmax.f32 %v611, 0.0
        %v662 = vmax.f32 %v613, 0.0
        %v663 = vmax.f32 %v617, 0.0
        %v664 = vmax.f32 %v619, 0.0
        %v665 = vmax.f32 %v621, 0.0
        %v666 = vmax.f32 %v623, 0.0
        %v667 = vmax.f32 %v627, 0.0
        %v668 = vmax.f32 %v629, 0.0
        %v669 = vmax.f32 %v631, 0.0
        %v670 = vmax.f32 %v633, 0.0
        %v671 = vmax.f32 %v637, 0.0
        %v672 = vmax.f32 %v639, 0.0
        %v673 = vmax.f32 %v641, 0.0
        %v674 = vmax.f32 %v643, 0.0
        %v675 = vmax.f32 %v647, 0.0
        %v676 = vmax.f32 %v649, 0.0
        %v677 = vmax.f32 %v651, 0.0
        %v678 = vmax.f32 %v653, 0.0
        %679 = vst [vmem:[#allocation2] sm:$0xff] %v655
        %680 = vst [vmem:[#allocation2 + $0x8] sm:$0xff] %v656
        %681 = vst [vmem:[#allocation2 + $0x10] sm:$0xff] %v657
        %682 = vst [vmem:[#allocation2 + $0x18] sm:$0xff] %v658
        %683 = vst [vmem:[#allocation2 + $0x20] sm:$0xff] %v659
        %684 = vst [vmem:[#allocation2 + $0x28] sm:$0xff] %v660
        %685 = vst [vmem:[#allocation2 + $0x30] sm:$0xff] %v661
        %686 = vst [vmem:[#allocation2 + $0x38] sm:$0xff] %v662
        %687 = vst [vmem:[#allocation2 + $0x40] sm:$0xff] %v663
        %688 = vst [vmem:[#allocation2 + $0x48] sm:$0xff] %v664
        %689 = vst [vmem:[#allocation2 + $0x50] sm:$0xff] %v665
        %690 = vst [vmem:[#allocation2 + $0x58] sm:$0xff] %v666
        %691 = vst [vmem:[#allocation2 + $0x60] sm:$0xff] %v667
        %692 = vst [vmem:[#allocation2 + $0x68] sm:$0xff] %v668
        %693 = vst [vmem:[#allocation2 + $0x70] sm:$0xff] %v669
        %694 = vst [vmem:[#allocation2 + $0x78] sm:$0xff] %v670
        %695 = vst [vmem:[#allocation2 + $0x80] sm:$0xff] %v671
        %696 = vst [vmem:[#allocation2 + $0x88] sm:$0xff] %v672
        %697 = vst [vmem:[#allocation2 + $0x90] sm:$0xff] %v673
        %698 = vst [vmem:[#allocation2 + $0x98] sm:$0xff] %v674
        %699 = vst [vmem:[#allocation2 + $0xa0] sm:$0xff] %v675
        %700 = vst [vmem:[#allocation2 + $0xa8] sm:$0xff] %v676
        %701 = vst [vmem:[#allocation2 + $0xb0] sm:$0xff] %v677
        %702 = vst [vmem:[#allocation2 + $0xb8] sm:$0xff] %v678
        %v703 = vld [vmem:[#allocation2] sm:$0xff]
        %v704 = vld [vmem:[#allocation2 + $0x8] sm:$0xff]
        %v705 = vld [vmem:[#allocation2 + $0x10] sm:$0xff]
        %v706 = vld [vmem:[#allocation2 + $0x18] sm:$0xff]
        %v707 = vld [vmem:[#allocation2] sm:$0xfe]
        %v708 = vld [vmem:[#allocation2 + $0x8] sm:$0xfe]
        %v709 = vld [vmem:[#allocation2 + $0x20] sm:$0x1]
        %v710 = vld [vmem:[#allocation2 + $0x28] sm:$0x1]
        %v711 = vld [vmem:[#allocation2] sm:$0xfc]
        %v712 = vld [vmem:[#allocation2 + $0x8] sm:$0xfc]
        %v713 = vld [vmem:[#allocation2 + $0x20] sm:$0x3]
        %v714 = vld [vmem:[#allocation2 + $0x28] sm:$0x3]
        %vm721 = vcmask 1046528
        %v722 = vrot.slane %v707, 1
        %v723 = vrot.slane %v705, 1
        %v724 = vsel %vm721, %v722, %v723
        %v725 = vrot.slane %v708, 1
        %v726 = vrot.slane %v706, 1
        %v727 = vsel %vm721, %v725, %v726
        %v728 = vrot.slane %v709, 1
        %v729 = vsel %vm721, %v723, %v728
        %v730 = vrot.slane %v710, 1
        %v731 = vsel %vm721, %v726, %v730
        %vm740 = vcmask 1045504
        %v741 = vrot.slane %v711, 2
        %v742 = vrot.slane %v705, 2
        %v743 = vsel %vm740, %v741, %v742
        %v744 = vrot.slane %v712, 2
        %v745 = vrot.slane %v706, 2
        %v746 = vsel %vm740, %v744, %v745
        %v747 = vrot.slane %v713, 2
        %v748 = vsel %vm740, %v742, %v747
        %v749 = vrot.slane %v714, 2
        %v750 = vsel %vm740, %v745, %v749
        %v755 = vld [vmem:[#allocation2 + $0x30] sm:$0xff]
        %v756 = vld [vmem:[#allocation2 + $0x38] sm:$0xff]
        %v757 = vld [vmem:[#allocation2 + $0x40] sm:$0xff]
        %v758 = vld [vmem:[#allocation2 + $0x48] sm:$0xff]
        %v759 = vld [vmem:[#allocation2 + $0x30] sm:$0xfe]
        %v760 = vld [vmem:[#allocation2 + $0x38] sm:$0xfe]
        %v761 = vld [vmem:[#allocation2 + $0x50] sm:$0x1]
        %v762 = vld [vmem:[#allocation2 + $0x58] sm:$0x1]
        %v763 = vld [vmem:[#allocation2 + $0x30] sm:$0xfc]
        %v764 = vld [vmem:[#allocation2 + $0x38] sm:$0xfc]
        %v765 = vld [vmem:[#allocation2 + $0x50] sm:$0x3]
        %v766 = vld [vmem:[#allocation2 + $0x58] sm:$0x3]
        %v773 = vrot.slane %v759, 1
        %v774 = vrot.slane %v757, 1
        %v775 = vsel %vm721, %v773, %v774
        %v776 = vrot.slane %v760, 1
        %v777 = vrot.slane %v758, 1
        %v778 = vsel %vm721, %v776, %v777
        %v779 = vrot.slane %v761, 1
        %v780 = vsel %vm721, %v774, %v779
        %v781 = vrot.slane %v762, 1
        %v782 = vsel %vm721, %v777, %v781
        %v791 = vrot.slane %v763, 2
        %v792 = vrot.slane %v757, 2
        %v793 = vsel %vm740, %v791, %v792
        %v794 = vrot.slane %v764, 2
        %v795 = vrot.slane %v758, 2
        %v796 = vsel %vm740, %v794, %v795
        %v797 = vrot.slane %v765, 2
        %v798 = vsel %vm740, %v792, %v797
        %v799 = vrot.slane %v766, 2
        %v800 = vsel %vm740, %v795, %v799
        %v805 = vld [vmem:[#allocation2 + $0x60] sm:$0xff]
        %v806 = vld [vmem:[#allocation2 + $0x68] sm:$0xff]
        %v807 = vld [vmem:[#allocation2 + $0x70] sm:$0xff]
        %v808 = vld [vmem:[#allocation2 + $0x78] sm:$0xff]
        %v809 = vld [vmem:[#allocation2 + $0x60] sm:$0xfe]
        %v810 = vld [vmem:[#allocation2 + $0x68] sm:$0xfe]
        %v811 = vld [vmem:[#allocation2 + $0x80] sm:$0x1]
        %v812 = vld [vmem:[#allocation2 + $0x88] sm:$0x1]
        %v813 = vld [vmem:[#allocation2 + $0x60] sm:$0xfc]
        %v814 = vld [vmem:[#allocation2 + $0x68] sm:$0xfc]
        %v815 = vld [vmem:[#allocation2 + $0x80] sm:$0x3]
        %v816 = vld [vmem:[#allocation2 + $0x88] sm:$0x3]
        %v823 = vrot.slane %v809, 1
        %v824 = vrot.slane %v807, 1
        %v825 = vsel %vm721, %v823, %v824
        %v826 = vrot.slane %v810, 1
        %v827 = vrot.slane %v808, 1
        %v828 = vsel %vm721, %v826, %v827
        %v829 = vrot.slane %v811, 1
        %v830 = vsel %vm721, %v824, %v829
        %v831 = vrot.slane %v812, 1
        %v832 = vsel %vm721, %v827, %v831
        %v841 = vrot.slane %v813, 2
        %v842 = vrot.slane %v807, 2
        %v843 = vsel %vm740, %v841, %v842
        %v844 = vrot.slane %v814, 2
        %v845 = vrot.slane %v808, 2
        %v846 = vsel %vm740, %v844, %v845
        %v847 = vrot.slane %v815, 2
        %v848 = vsel %vm740, %v842, %v847
        %v849 = vrot.slane %v816, 2
        %v850 = vsel %vm740, %v845, %v849
        %v855 = vld [vmem:[#allocation2 + $0x90] sm:$0xff]
        %v856 = vld [vmem:[#allocation2 + $0x98] sm:$0xff]
        %v857 = vld [vmem:[#allocation2 + $0xa0] sm:$0xff]
        %v858 = vld [vmem:[#allocation2 + $0xa8] sm:$0xff]
        %v859 = vld [vmem:[#allocation2 + $0x90] sm:$0xfe]
        %v860 = vld [vmem:[#allocation2 + $0x98] sm:$0xfe]
        %v861 = vld [vmem:[#allocation2 + $0xa0] sm:$0xff]
        %v862 = vld [vmem:[#allocation2 + $0xa8] sm:$0xff]
        %v863 = vld [vmem:[#allocation2 + $0xb0] sm:$0x1]
        %v864 = vld [vmem:[#allocation2 + $0xb8] sm:$0x1]
        %v865 = vld [vmem:[#allocation2 + $0x90] sm:$0xfc]
        %v866 = vld [vmem:[#allocation2 + $0x98] sm:$0xfc]
        %v867 = vld [vmem:[#allocation2 + $0xb0] sm:$0x3]
        %v868 = vld [vmem:[#allocation2 + $0xb8] sm:$0x3]
        %v875 = vrot.slane %v859, 1
        %v876 = vrot.slane %v861, 1
        %v877 = vsel %vm721, %v875, %v876
        %v878 = vrot.slane %v860, 1
        %v879 = vrot.slane %v862, 1
        %v880 = vsel %vm721, %v878, %v879
        %v881 = vrot.slane %v863, 1
        %v882 = vsel %vm721, %v876, %v881
        %v883 = vrot.slane %v864, 1
        %v884 = vsel %vm721, %v879, %v883
        %v893 = vrot.slane %v865, 2
        %v894 = vrot.slane %v861, 2
        %v895 = vsel %vm740, %v893, %v894
        %v896 = vrot.slane %v866, 2
        %v897 = vrot.slane %v862, 2
        %v898 = vsel %vm740, %v896, %v897
        %v899 = vrot.slane %v867, 2
        %v900 = vsel %vm740, %v894, %v899
        %v901 = vrot.slane %v868, 2
        %v902 = vsel %vm740, %v897, %v901
        %v907 = vpack.c.bf16 %v705, %v703
        %v908 = vpack.c.bf16 %v706, %v704
        %v909 = vpack.c.bf16 %v729, %v724
        %v910 = vpack.c.bf16 %v731, %v727
        %v911 = vpack.c.bf16 %v748, %v743
        %v912 = vpack.c.bf16 %v750, %v746
        %v913 = vpack.c.bf16 %v757, %v755
        %v914 = vpack.c.bf16 %v758, %v756
        %v915 = vpack.c.bf16 %v780, %v775
        %v916 = vpack.c.bf16 %v782, %v778
        %v917 = vpack.c.bf16 %v798, %v793
        %v918 = vpack.c.bf16 %v800, %v796
        %v919 = vpack.c.bf16 %v807, %v805
        %v920 = vpack.c.bf16 %v808, %v806
        %v921 = vpack.c.bf16 %v830, %v825
        %v922 = vpack.c.bf16 %v832, %v828
        %v923 = vpack.c.bf16 %v848, %v843
        %v924 = vpack.c.bf16 %v850, %v846
        %v925 = vpack.c.bf16 %v857, %v855
        %v926 = vpack.c.bf16 %v858, %v856
        %v927 = vpack.c.bf16 %v882, %v877
        %v928 = vpack.c.bf16 %v884, %v880
        %v929 = vpack.c.bf16 %v900, %v895
        %v930 = vpack.c.bf16 %v902, %v898
        %v931 = vld [vmem:[#allocation3] sm:$0xff]
        %v932 = vld [vmem:[#allocation3 + $0x8] sm:$0xff]
        %v933 = vld [vmem:[#allocation3 + $0x10] sm:$0xff]
        %v934 = vld [vmem:[#allocation3 + $0x18] sm:$0xff]
        %v935 = vld [vmem:[#allocation3 + $0x20] sm:$0xff]
        %v936 = vld [vmem:[#allocation3 + $0x28] sm:$0xff]
        %v937 = vld [vmem:[#allocation3 + $0x30] sm:$0xff]
        %v938 = vld [vmem:[#allocation3 + $0x38] sm:$0xff]
        %v939 = vld [vmem:[#allocation3 + $0x40] sm:$0xff]
        %v940 = vld [vmem:[#allocation3 + $0x48] sm:$0xff]
        %v941 = vld [vmem:[#allocation3 + $0x50] sm:$0xff]
        %v942 = vld [vmem:[#allocation3 + $0x58] sm:$0xff]
        %v943 = vld [vmem:[#allocation3 + $0x60] sm:$0xff]
        %v944 = vld [vmem:[#allocation3 + $0x68] sm:$0xff]
        %v945 = vld [vmem:[#allocation3 + $0x70] sm:$0xff]
        %v946 = vld [vmem:[#allocation3 + $0x78] sm:$0xff]
        %v947 = vld [vmem:[#allocation3 + $0x80] sm:$0xff]
        %v948 = vld [vmem:[#allocation3 + $0x88] sm:$0xff]
        %v949 = vld [vmem:[#allocation3 + $0x90] sm:$0xff]
        %v950 = vld [vmem:[#allocation3 + $0x98] sm:$0xff]
        %v951 = vld [vmem:[#allocation3 + $0xa0] sm:$0xff]
        %v952 = vld [vmem:[#allocation3 + $0xa8] sm:$0xff]
        %v953 = vld [vmem:[#allocation3 + $0xb0] sm:$0xff]
        %v954 = vld [vmem:[#allocation3 + $0xb8] sm:$0xff]
        %v955 = vld [vmem:[#allocation3 + $0xc0] sm:$0xff]
        %v956 = vld [vmem:[#allocation3 + $0xc8] sm:$0xff]
        %v957 = vld [vmem:[#allocation3 + $0xd0] sm:$0xff]
        %v958 = vld [vmem:[#allocation3 + $0xd8] sm:$0xff]
        %v959 = vld [vmem:[#allocation3 + $0xe0] sm:$0xff]
        %v960 = vld [vmem:[#allocation3 + $0xe8] sm:$0xff]
        %v961 = vld [vmem:[#allocation3 + $0xf0] sm:$0xff]
        %v962 = vld [vmem:[#allocation3 + $0xf8] sm:$0xff]
        %v963 = vld [vmem:[#allocation3 + $0x100] sm:$0xff]
        %v964 = vld [vmem:[#allocation3 + $0x108] sm:$0xff]
        %v965 = vld [vmem:[#allocation3 + $0x110] sm:$0xff]
        %v966 = vld [vmem:[#allocation3 + $0x118] sm:$0xff]
        %v967 = vld [vmem:[#allocation3 + $0x120] sm:$0xff]
        %v968 = vld [vmem:[#allocation3 + $0x128] sm:$0xff]
        %v969 = vld [vmem:[#allocation3 + $0x130] sm:$0xff]
        %v970 = vld [vmem:[#allocation3 + $0x138] sm:$0xff]
        %v971 = vld [vmem:[#allocation3 + $0x140] sm:$0xff]
        %v972 = vld [vmem:[#allocation3 + $0x148] sm:$0xff]
        %v973 = vld [vmem:[#allocation3 + $0x150] sm:$0xff]
        %v974 = vld [vmem:[#allocation3 + $0x158] sm:$0xff]
        %v975 = vld [vmem:[#allocation3 + $0x160] sm:$0xff]
        %v976 = vld [vmem:[#allocation3 + $0x168] sm:$0xff]
        %v977 = vld [vmem:[#allocation3 + $0x170] sm:$0xff]
        %v978 = vld [vmem:[#allocation3 + $0x178] sm:$0xff]
        %v979 = vld [vmem:[#allocation3 + $0x180] sm:$0xff]
        %v980 = vld [vmem:[#allocation3 + $0x188] sm:$0xff]
        %v981 = vld [vmem:[#allocation3 + $0x190] sm:$0xff]
        %v982 = vld [vmem:[#allocation3 + $0x198] sm:$0xff]
        %v983 = vld [vmem:[#allocation3 + $0x1a0] sm:$0xff]
        %v984 = vld [vmem:[#allocation3 + $0x1a8] sm:$0xff]
        %v985 = vld [vmem:[#allocation3 + $0x1b0] sm:$0xff]
        %v986 = vld [vmem:[#allocation3 + $0x1b8] sm:$0xff]
        %v987 = vld [vmem:[#allocation3 + $0x1c0] sm:$0xff]
        %v988 = vld [vmem:[#allocation3 + $0x1c8] sm:$0xff]
        %v989 = vld [vmem:[#allocation3 + $0x1d0] sm:$0xff]
        %v990 = vld [vmem:[#allocation3 + $0x1d8] sm:$0xff]
        %v991 = vld [vmem:[#allocation3 + $0x1e0] sm:$0xff]
        %v992 = vld [vmem:[#allocation3 + $0x1e8] sm:$0xff]
        %v993 = vld [vmem:[#allocation3 + $0x1f0] sm:$0xff]
        %v994 = vld [vmem:[#allocation3 + $0x1f8] sm:$0xff]
        %v995 = vld [vmem:[#allocation3 + $0x200] sm:$0xff]
        %v996 = vld [vmem:[#allocation3 + $0x208] sm:$0xff]
        %v997 = vld [vmem:[#allocation3 + $0x210] sm:$0xff]
        %v998 = vld [vmem:[#allocation3 + $0x218] sm:$0xff]
        %v999 = vld [vmem:[#allocation3 + $0x220] sm:$0xff]
        %v1000 = vld [vmem:[#allocation3 + $0x228] sm:$0xff]
        %v1001 = vld [vmem:[#allocation3 + $0x230] sm:$0xff]
        %v1002 = vld [vmem:[#allocation3 + $0x238] sm:$0xff]
        %v1003 = vld [vmem:[#allocation3 + $0x240] sm:$0xff]
        %v1004 = vld [vmem:[#allocation3 + $0x248] sm:$0xff]
        %v1005 = vld [vmem:[#allocation3 + $0x250] sm:$0xff]
        %v1006 = vld [vmem:[#allocation3 + $0x258] sm:$0xff]
        %v1007 = vld [vmem:[#allocation3 + $0x260] sm:$0xff]
        %v1008 = vld [vmem:[#allocation3 + $0x268] sm:$0xff]
        %v1009 = vld [vmem:[#allocation3 + $0x270] sm:$0xff]
        %v1010 = vld [vmem:[#allocation3 + $0x278] sm:$0xff]
        %v1011 = vld [vmem:[#allocation3 + $0x280] sm:$0xff]
        %v1012 = vld [vmem:[#allocation3 + $0x288] sm:$0xff]
        %v1013 = vld [vmem:[#allocation3 + $0x290] sm:$0xff]
        %v1014 = vld [vmem:[#allocation3 + $0x298] sm:$0xff]
        %v1015 = vld [vmem:[#allocation3 + $0x2a0] sm:$0xff]
        %v1016 = vld [vmem:[#allocation3 + $0x2a8] sm:$0xff]
        %v1017 = vld [vmem:[#allocation3 + $0x2b0] sm:$0xff]
        %v1018 = vld [vmem:[#allocation3 + $0x2b8] sm:$0xff]
        %v1019 = vld [vmem:[#allocation3 + $0x2c0] sm:$0xff]
        %v1020 = vld [vmem:[#allocation3 + $0x2c8] sm:$0xff]
        %v1021 = vld [vmem:[#allocation3 + $0x2d0] sm:$0xff]
        %v1022 = vld [vmem:[#allocation3 + $0x2d8] sm:$0xff]
        %v1023 = vld [vmem:[#allocation3 + $0x2e0] sm:$0xff]
        %v1024 = vld [vmem:[#allocation3 + $0x2e8] sm:$0xff]
        %v1025 = vld [vmem:[#allocation3 + $0x2f0] sm:$0xff]
        %v1026 = vld [vmem:[#allocation3 + $0x2f8] sm:$0xff]
        %v1027 = vld [vmem:[%s4] sm:$0x3]
        %v1029 = vlaneseq
        %v1030 = vshrl.u32 %v1029, 7
        %v1031 = vsub.s32 0, %v1030
        %v1032 = vrot.slane %v1027, %v1031
        %v1033 = vlaneseq
        %v1034 = vshrl.u32 %v1033, 7
        %v1035 = vsub.s32 1, %v1034
        %v1036 = vrot.slane %v1027, %v1035
        %v1135 = vunpack.c.l.b16 %v931
        %v1136 = vunpack.c.h.b16 %v931
        %v1137 = vunpack.c.l.b16 %v932
        %v1138 = vunpack.c.h.b16 %v932
        %v1139 = vunpack.c.l.b16 %v933
        %v1140 = vunpack.c.h.b16 %v933
        %v1141 = vunpack.c.l.b16 %v934
        %v1142 = vunpack.c.h.b16 %v934
        %v1143 = vunpack.c.l.b16 %v935
        %v1144 = vunpack.c.h.b16 %v935
        %v1145 = vunpack.c.l.b16 %v936
        %v1146 = vunpack.c.h.b16 %v936
        %v1147 = vunpack.c.l.b16 %v937
        %v1148 = vunpack.c.h.b16 %v937
        %v1149 = vunpack.c.l.b16 %v938
        %v1150 = vunpack.c.h.b16 %v938
        %v1151 = vunpack.c.l.b16 %v939
        %v1152 = vunpack.c.h.b16 %v939
        %v1153 = vunpack.c.l.b16 %v940
        %v1154 = vunpack.c.h.b16 %v940
        %v1155 = vunpack.c.l.b16 %v941
        %v1156 = vunpack.c.h.b16 %v941
        %v1157 = vunpack.c.l.b16 %v942
        %v1158 = vunpack.c.h.b16 %v942
        %v1159 = vunpack.c.l.b16 %v943
        %v1160 = vunpack.c.h.b16 %v943
        %v1161 = vunpack.c.l.b16 %v944
        %v1162 = vunpack.c.h.b16 %v944
        %v1163 = vunpack.c.l.b16 %v945
        %v1164 = vunpack.c.h.b16 %v945
        %v1165 = vunpack.c.l.b16 %v946
        %v1166 = vunpack.c.h.b16 %v946
        %v1167 = vunpack.c.l.b16 %v947
        %v1168 = vunpack.c.h.b16 %v947
        %v1169 = vunpack.c.l.b16 %v948
        %v1170 = vunpack.c.h.b16 %v948
        %v1171 = vunpack.c.l.b16 %v949
        %v1172 = vunpack.c.h.b16 %v949
        %v1173 = vunpack.c.l.b16 %v950
        %v1174 = vunpack.c.h.b16 %v950
        %v1175 = vunpack.c.l.b16 %v951
        %v1176 = vunpack.c.h.b16 %v951
        %v1177 = vunpack.c.l.b16 %v952
        %v1178 = vunpack.c.h.b16 %v952
        %v1179 = vunpack.c.l.b16 %v953
        %v1180 = vunpack.c.h.b16 %v953
        %v1181 = vunpack.c.l.b16 %v954
        %v1182 = vunpack.c.h.b16 %v954
        %v1183 = vunpack.c.l.b16 %v955
        %v1184 = vunpack.c.h.b16 %v955
        %v1185 = vunpack.c.l.b16 %v956
        %v1186 = vunpack.c.h.b16 %v956
        %v1187 = vunpack.c.l.b16 %v957
        %v1188 = vunpack.c.h.b16 %v957
        %v1189 = vunpack.c.l.b16 %v958
        %v1190 = vunpack.c.h.b16 %v958
        %v1191 = vunpack.c.l.b16 %v959
        %v1192 = vunpack.c.h.b16 %v959
        %v1193 = vunpack.c.l.b16 %v960
        %v1194 = vunpack.c.h.b16 %v960
        %v1195 = vunpack.c.l.b16 %v961
        %v1196 = vunpack.c.h.b16 %v961
        %v1197 = vunpack.c.l.b16 %v962
        %v1198 = vunpack.c.h.b16 %v962
        %v1199 = vunpack.c.l.b16 %v963
        %v1200 = vunpack.c.h.b16 %v963
        %v1201 = vunpack.c.l.b16 %v964
        %v1202 = vunpack.c.h.b16 %v964
        %v1203 = vunpack.c.l.b16 %v965
        %v1204 = vunpack.c.h.b16 %v965
        %v1205 = vunpack.c.l.b16 %v966
        %v1206 = vunpack.c.h.b16 %v966
        %v1207 = vunpack.c.l.b16 %v967
        %v1208 = vunpack.c.h.b16 %v967
        %v1209 = vunpack.c.l.b16 %v968
        %v1210 = vunpack.c.h.b16 %v968
        %v1211 = vunpack.c.l.b16 %v969
        %v1212 = vunpack.c.h.b16 %v969
        %v1213 = vunpack.c.l.b16 %v970
        %v1214 = vunpack.c.h.b16 %v970
        %v1215 = vunpack.c.l.b16 %v971
        %v1216 = vunpack.c.h.b16 %v971
        %v1217 = vunpack.c.l.b16 %v972
        %v1218 = vunpack.c.h.b16 %v972
        %v1219 = vunpack.c.l.b16 %v973
        %v1220 = vunpack.c.h.b16 %v973
        %v1221 = vunpack.c.l.b16 %v974
        %v1222 = vunpack.c.h.b16 %v974
        %v1223 = vunpack.c.l.b16 %v975
        %v1224 = vunpack.c.h.b16 %v975
        %v1225 = vunpack.c.l.b16 %v976
        %v1226 = vunpack.c.h.b16 %v976
        %v1227 = vunpack.c.l.b16 %v977
        %v1228 = vunpack.c.h.b16 %v977
        %v1229 = vunpack.c.l.b16 %v978
        %v1230 = vunpack.c.h.b16 %v978
        %v1231 = vunpack.c.l.b16 %v979
        %v1232 = vunpack.c.h.b16 %v979
        %v1233 = vunpack.c.l.b16 %v980
        %v1234 = vunpack.c.h.b16 %v980
        %v1235 = vunpack.c.l.b16 %v981
        %v1236 = vunpack.c.h.b16 %v981
        %v1237 = vunpack.c.l.b16 %v982
        %v1238 = vunpack.c.h.b16 %v982
        %v1239 = vunpack.c.l.b16 %v983
        %v1240 = vunpack.c.h.b16 %v983
        %v1241 = vunpack.c.l.b16 %v984
        %v1242 = vunpack.c.h.b16 %v984
        %v1243 = vunpack.c.l.b16 %v985
        %v1244 = vunpack.c.h.b16 %v985
        %v1245 = vunpack.c.l.b16 %v986
        %v1246 = vunpack.c.h.b16 %v986
        %v1247 = vunpack.c.l.b16 %v987
        %v1248 = vunpack.c.h.b16 %v987
        %v1249 = vunpack.c.l.b16 %v988
        %v1250 = vunpack.c.h.b16 %v988
        %v1251 = vunpack.c.l.b16 %v989
        %v1252 = vunpack.c.h.b16 %v989
        %v1253 = vunpack.c.l.b16 %v990
        %v1254 = vunpack.c.h.b16 %v990
        %v1255 = vunpack.c.l.b16 %v991
        %v1256 = vunpack.c.h.b16 %v991
        %v1257 = vunpack.c.l.b16 %v992
        %v1258 = vunpack.c.h.b16 %v992
        %v1259 = vunpack.c.l.b16 %v993
        %v1260 = vunpack.c.h.b16 %v993
        %v1261 = vunpack.c.l.b16 %v994
        %v1262 = vunpack.c.h.b16 %v994
        %v1263 = vunpack.c.l.b16 %v995
        %v1264 = vunpack.c.h.b16 %v995
        %v1265 = vunpack.c.l.b16 %v996
        %v1266 = vunpack.c.h.b16 %v996
        %v1267 = vunpack.c.l.b16 %v997
        %v1268 = vunpack.c.h.b16 %v997
        %v1269 = vunpack.c.l.b16 %v998
        %v1270 = vunpack.c.h.b16 %v998
        %v1271 = vunpack.c.l.b16 %v999
        %v1272 = vunpack.c.h.b16 %v999
        %v1273 = vunpack.c.l.b16 %v1000
        %v1274 = vunpack.c.h.b16 %v1000
        %v1275 = vunpack.c.l.b16 %v1001
        %v1276 = vunpack.c.h.b16 %v1001
        %v1277 = vunpack.c.l.b16 %v1002
        %v1278 = vunpack.c.h.b16 %v1002
        %v1279 = vunpack.c.l.b16 %v1003
        %v1280 = vunpack.c.h.b16 %v1003
        %v1281 = vunpack.c.l.b16 %v1004
        %v1282 = vunpack.c.h.b16 %v1004
        %v1283 = vunpack.c.l.b16 %v1005
        %v1284 = vunpack.c.h.b16 %v1005
        %v1285 = vunpack.c.l.b16 %v1006
        %v1286 = vunpack.c.h.b16 %v1006
        %v1287 = vunpack.c.l.b16 %v1007
        %v1288 = vunpack.c.h.b16 %v1007
        %v1289 = vunpack.c.l.b16 %v1008
        %v1290 = vunpack.c.h.b16 %v1008
        %v1291 = vunpack.c.l.b16 %v1009
        %v1292 = vunpack.c.h.b16 %v1009
        %v1293 = vunpack.c.l.b16 %v1010
        %v1294 = vunpack.c.h.b16 %v1010
        %v1295 = vunpack.c.l.b16 %v1011
        %v1296 = vunpack.c.h.b16 %v1011
        %v1297 = vunpack.c.l.b16 %v1012
        %v1298 = vunpack.c.h.b16 %v1012
        %v1299 = vunpack.c.l.b16 %v1013
        %v1300 = vunpack.c.h.b16 %v1013
        %v1301 = vunpack.c.l.b16 %v1014
        %v1302 = vunpack.c.h.b16 %v1014
        %v1303 = vunpack.c.l.b16 %v1015
        %v1304 = vunpack.c.h.b16 %v1015
        %v1305 = vunpack.c.l.b16 %v1016
        %v1306 = vunpack.c.h.b16 %v1016
        %v1307 = vunpack.c.l.b16 %v1017
        %v1308 = vunpack.c.h.b16 %v1017
        %v1309 = vunpack.c.l.b16 %v1018
        %v1310 = vunpack.c.h.b16 %v1018
        %v1311 = vunpack.c.l.b16 %v1019
        %v1312 = vunpack.c.h.b16 %v1019
        %v1313 = vunpack.c.l.b16 %v1020
        %v1314 = vunpack.c.h.b16 %v1020
        %v1315 = vunpack.c.l.b16 %v1021
        %v1316 = vunpack.c.h.b16 %v1021
        %v1317 = vunpack.c.l.b16 %v1022
        %v1318 = vunpack.c.h.b16 %v1022
        %v1319 = vunpack.c.l.b16 %v1023
        %v1320 = vunpack.c.h.b16 %v1023
        %v1321 = vunpack.c.l.b16 %v1024
        %v1322 = vunpack.c.h.b16 %v1024
        %v1323 = vunpack.c.l.b16 %v1025
        %v1324 = vunpack.c.h.b16 %v1025
        %v1325 = vunpack.c.l.b16 %v1026
        %v1326 = vunpack.c.h.b16 %v1026
        %v1327 = vpack.c.b16 %v1137, %v1135
        %v1328 = vpack.c.b16 %v1138, %v1136
        %v1329 = vpack.c.b16 %v1141, %v1139
        %v1330 = vpack.c.b16 %v1142, %v1140
        %v1331 = vpack.c.b16 %v1145, %v1143
        %v1332 = vpack.c.b16 %v1146, %v1144
        %v1333 = vpack.c.b16 %v1149, %v1147
        %v1334 = vpack.c.b16 %v1150, %v1148
        %v1335 = vpack.c.b16 %v1153, %v1151
        %v1336 = vpack.c.b16 %v1154, %v1152
        %v1337 = vpack.c.b16 %v1157, %v1155
        %v1338 = vpack.c.b16 %v1158, %v1156
        %v1339 = vpack.c.b16 %v1161, %v1159
        %v1340 = vpack.c.b16 %v1162, %v1160
        %v1341 = vpack.c.b16 %v1165, %v1163
        %v1342 = vpack.c.b16 %v1166, %v1164
        %v1343 = vpack.c.b16 %v1169, %v1167
        %v1344 = vpack.c.b16 %v1170, %v1168
        %v1345 = vpack.c.b16 %v1173, %v1171
        %v1346 = vpack.c.b16 %v1174, %v1172
        %v1347 = vpack.c.b16 %v1177, %v1175
        %v1348 = vpack.c.b16 %v1178, %v1176
        %v1349 = vpack.c.b16 %v1181, %v1179
        %v1350 = vpack.c.b16 %v1182, %v1180
        %v1351 = vpack.c.b16 %v1185, %v1183
        %v1352 = vpack.c.b16 %v1186, %v1184
        %v1353 = vpack.c.b16 %v1189, %v1187
        %v1354 = vpack.c.b16 %v1190, %v1188
        %v1355 = vpack.c.b16 %v1193, %v1191
        %v1356 = vpack.c.b16 %v1194, %v1192
        %v1357 = vpack.c.b16 %v1197, %v1195
        %v1358 = vpack.c.b16 %v1198, %v1196
        %v1359 = vpack.c.b16 %v1201, %v1199
        %v1360 = vpack.c.b16 %v1202, %v1200
        %v1361 = vpack.c.b16 %v1205, %v1203
        %v1362 = vpack.c.b16 %v1206, %v1204
        %v1363 = vpack.c.b16 %v1209, %v1207
        %v1364 = vpack.c.b16 %v1210, %v1208
        %v1365 = vpack.c.b16 %v1213, %v1211
        %v1366 = vpack.c.b16 %v1214, %v1212
        %v1367 = vpack.c.b16 %v1217, %v1215
        %v1368 = vpack.c.b16 %v1218, %v1216
        %v1369 = vpack.c.b16 %v1221, %v1219
        %v1370 = vpack.c.b16 %v1222, %v1220
        %v1371 = vpack.c.b16 %v1225, %v1223
        %v1372 = vpack.c.b16 %v1226, %v1224
        %v1373 = vpack.c.b16 %v1229, %v1227
        %v1374 = vpack.c.b16 %v1230, %v1228
        %v1375 = vpack.c.b16 %v1233, %v1231
        %v1376 = vpack.c.b16 %v1234, %v1232
        %v1377 = vpack.c.b16 %v1237, %v1235
        %v1378 = vpack.c.b16 %v1238, %v1236
        %v1379 = vpack.c.b16 %v1241, %v1239
        %v1380 = vpack.c.b16 %v1242, %v1240
        %v1381 = vpack.c.b16 %v1245, %v1243
        %v1382 = vpack.c.b16 %v1246, %v1244
        %v1383 = vpack.c.b16 %v1249, %v1247
        %v1384 = vpack.c.b16 %v1250, %v1248
        %v1385 = vpack.c.b16 %v1253, %v1251
        %v1386 = vpack.c.b16 %v1254, %v1252
        %v1387 = vpack.c.b16 %v1257, %v1255
        %v1388 = vpack.c.b16 %v1258, %v1256
        %v1389 = vpack.c.b16 %v1261, %v1259
        %v1390 = vpack.c.b16 %v1262, %v1260
        %v1391 = vpack.c.b16 %v1265, %v1263
        %v1392 = vpack.c.b16 %v1266, %v1264
        %v1393 = vpack.c.b16 %v1269, %v1267
        %v1394 = vpack.c.b16 %v1270, %v1268
        %v1395 = vpack.c.b16 %v1273, %v1271
        %v1396 = vpack.c.b16 %v1274, %v1272
        %v1397 = vpack.c.b16 %v1277, %v1275
        %v1398 = vpack.c.b16 %v1278, %v1276
        %v1399 = vpack.c.b16 %v1281, %v1279
        %v1400 = vpack.c.b16 %v1282, %v1280
        %v1401 = vpack.c.b16 %v1285, %v1283
        %v1402 = vpack.c.b16 %v1286, %v1284
        %v1403 = vpack.c.b16 %v1289, %v1287
        %v1404 = vpack.c.b16 %v1290, %v1288
        %v1405 = vpack.c.b16 %v1293, %v1291
        %v1406 = vpack.c.b16 %v1294, %v1292
        %v1407 = vpack.c.b16 %v1297, %v1295
        %v1408 = vpack.c.b16 %v1298, %v1296
        %v1409 = vpack.c.b16 %v1301, %v1299
        %v1410 = vpack.c.b16 %v1302, %v1300
        %v1411 = vpack.c.b16 %v1305, %v1303
        %v1412 = vpack.c.b16 %v1306, %v1304
        %v1413 = vpack.c.b16 %v1309, %v1307
        %v1414 = vpack.c.b16 %v1310, %v1308
        %v1415 = vpack.c.b16 %v1313, %v1311
        %v1416 = vpack.c.b16 %v1314, %v1312
        %v1417 = vpack.c.b16 %v1317, %v1315
        %v1418 = vpack.c.b16 %v1318, %v1316
        %v1419 = vpack.c.b16 %v1321, %v1319
        %v1420 = vpack.c.b16 %v1322, %v1320
        %v1421 = vpack.c.b16 %v1325, %v1323
        %v1422 = vpack.c.b16 %v1326, %v1324
        %1519 = vmatprep.subr.bf16.mxu0 %v1342
        %1520 = vmatpush1.bf16.msra.mxu0 %v1341
        %1521 = vmatprep.subr.bf16.mxu0 %v1340
        %1522 = vmatpush1.bf16.msra.mxu0 %v1339
        %1523 = vmatprep.subr.bf16.mxu0 %v1338
        %1524 = vmatpush1.bf16.msra.mxu0 %v1337
        %1525 = vmatprep.subr.bf16.mxu0 %v1336
        %1526 = vmatpush1.bf16.msra.mxu0 %v1335
        %1527 = vmatprep.subr.bf16.mxu0 %v1334
        %1528 = vmatpush1.bf16.msra.mxu0 %v1333
        %1529 = vmatprep.subr.bf16.mxu0 %v1332
        %1530 = vmatpush1.bf16.msra.mxu0 %v1331
        %1531 = vmatprep.subr.bf16.mxu0 %v1330
        %1532 = vmatpush1.bf16.msra.mxu0 %v1329
        %1533 = vmatprep.subr.bf16.mxu0 %v1328
        %1534 = vmatpush1.bf16.msra.mxu0 %v1327
        %1535 = vmatprep.subr.bf16.mxu0 %v1358
        %1536 = vmatpush2.bf16.msra.mxu0 %v1357
        %1537 = vmatprep.subr.bf16.mxu0 %v1356
        %1538 = vmatpush2.bf16.msra.mxu0 %v1355
        %1539 = vmatprep.subr.bf16.mxu0 %v1354
        %1540 = vmatpush2.bf16.msra.mxu0 %v1353
        %1541 = vmatprep.subr.bf16.mxu0 %v1352
        %1542 = vmatpush2.bf16.msra.mxu0 %v1351
        %1543 = vmatprep.subr.bf16.mxu0 %v1350
        %1544 = vmatpush2.bf16.msra.mxu0 %v1349
        %1545 = vmatprep.subr.bf16.mxu0 %v1348
        %1546 = vmatpush2.bf16.msra.mxu0 %v1347
        %1547 = vmatprep.subr.bf16.mxu0 %v1346
        %1548 = vmatpush2.bf16.msra.mxu0 %v1345
        %1549 = vmatprep.subr.bf16.mxu0 %v1344
        %1550 = vmatpush2.bf16.msra.mxu0 %v1343
        %1551 = vmatprep.mubr.bf16.mxu0 %v908
        %1552 = vmatmul.mubr.bf16.gmra.mxu0 %v907
        %v1553 = vpop.f32.mrf.mxu0
        %v1554 = vadd.f32 %v1032, %v1553
        %v1555 = vpop.f32.mrf.mxu0
        %v1556 = vadd.f32 %v1036, %v1555
        %v1557 = vpop.f32.mrf.mxu0
        %v1558 = vadd.f32 %v1032, %v1557
        %v1559 = vpop.f32.mrf.mxu0
        %v1560 = vadd.f32 %v1036, %v1559
        %1561 = vmatprep.mubr.bf16.mxu0 %v914
        %1562 = vmatmul.mubr.bf16.gmra.mxu0 %v913
        %v1563 = vpop.f32.mrf.mxu0
        %v1564 = vadd.f32 %v1032, %v1563
        %v1565 = vpop.f32.mrf.mxu0
        %v1566 = vadd.f32 %v1036, %v1565
        %v1567 = vpop.f32.mrf.mxu0
        %v1568 = vadd.f32 %v1032, %v1567
        %v1569 = vpop.f32.mrf.mxu0
        %v1570 = vadd.f32 %v1036, %v1569
        %1571 = vmatprep.mubr.bf16.mxu0 %v920
        %1572 = vmatmul.mubr.bf16.gmra.mxu0 %v919
        %v1573 = vpop.f32.mrf.mxu0
        %v1574 = vadd.f32 %v1032, %v1573
        %v1575 = vpop.f32.mrf.mxu0
        %v1576 = vadd.f32 %v1036, %v1575
        %v1577 = vpop.f32.mrf.mxu0
        %v1578 = vadd.f32 %v1032, %v1577
        %v1579 = vpop.f32.mrf.mxu0
        %v1580 = vadd.f32 %v1036, %v1579
        %1581 = vmatprep.mubr.bf16.mxu0 %v926
        %1582 = vmatmul.mubr.bf16.gmra.mxu0 %v925
        %v1583 = vpop.f32.mrf.mxu0
        %v1584 = vadd.f32 %v1032, %v1583
        %v1585 = vpop.f32.mrf.mxu0
        %v1586 = vadd.f32 %v1036, %v1585
        %v1587 = vpop.f32.mrf.mxu0
        %v1588 = vadd.f32 %v1032, %v1587
        %v1589 = vpop.f32.mrf.mxu0
        %v1590 = vadd.f32 %v1036, %v1589
        %1591 = vdwg.mxu0
        %1592 = vmatprep.subr.bf16.mxu0 %v1374
        %1593 = vmatpush1.bf16.msra.mxu0 %v1373
        %1594 = vmatprep.subr.bf16.mxu0 %v1372
        %1595 = vmatpush1.bf16.msra.mxu0 %v1371
        %1596 = vmatprep.subr.bf16.mxu0 %v1370
        %1597 = vmatpush1.bf16.msra.mxu0 %v1369
        %1598 = vmatprep.subr.bf16.mxu0 %v1368
        %1599 = vmatpush1.bf16.msra.mxu0 %v1367
        %1600 = vmatprep.subr.bf16.mxu0 %v1366
        %1601 = vmatpush1.bf16.msra.mxu0 %v1365
        %1602 = vmatprep.subr.bf16.mxu0 %v1364
        %1603 = vmatpush1.bf16.msra.mxu0 %v1363
        %1604 = vmatprep.subr.bf16.mxu0 %v1362
        %1605 = vmatpush1.bf16.msra.mxu0 %v1361
        %1606 = vmatprep.subr.bf16.mxu0 %v1360
        %1607 = vmatpush1.bf16.msra.mxu0 %v1359
        %1608 = vmatprep.subr.bf16.mxu0 %v1390
        %1609 = vmatpush2.bf16.msra.mxu0 %v1389
        %1610 = vmatprep.subr.bf16.mxu0 %v1388
        %1611 = vmatpush2.bf16.msra.mxu0 %v1387
        %1612 = vmatprep.subr.bf16.mxu0 %v1386
        %1613 = vmatpush2.bf16.msra.mxu0 %v1385
        %1614 = vmatprep.subr.bf16.mxu0 %v1384
        %1615 = vmatpush2.bf16.msra.mxu0 %v1383
        %1616 = vmatprep.subr.bf16.mxu0 %v1382
        %1617 = vmatpush2.bf16.msra.mxu0 %v1381
        %1618 = vmatprep.subr.bf16.mxu0 %v1380
        %1619 = vmatpush2.bf16.msra.mxu0 %v1379
        %1620 = vmatprep.subr.bf16.mxu0 %v1378
        %1621 = vmatpush2.bf16.msra.mxu0 %v1377
        %1622 = vmatprep.subr.bf16.mxu0 %v1376
        %1623 = vmatpush2.bf16.msra.mxu0 %v1375
        %1624 = vmatprep.mubr.bf16.mxu0 %v910
        %1625 = vmatmul.mubr.bf16.gmra.mxu0 %v909
        %v1626 = vpop.f32.mrf.mxu0
        %v1627 = vadd.f32 %v1554, %v1626
        %v1628 = vpop.f32.mrf.mxu0
        %v1629 = vadd.f32 %v1556, %v1628
        %v1630 = vpop.f32.mrf.mxu0
        %v1631 = vadd.f32 %v1558, %v1630
        %v1632 = vpop.f32.mrf.mxu0
        %v1633 = vadd.f32 %v1560, %v1632
        %1634 = vmatprep.mubr.bf16.mxu0 %v916
        %1635 = vmatmul.mubr.bf16.gmra.mxu0 %v915
        %v1636 = vpop.f32.mrf.mxu0
        %v1637 = vadd.f32 %v1564, %v1636
        %v1638 = vpop.f32.mrf.mxu0
        %v1639 = vadd.f32 %v1566, %v1638
        %v1640 = vpop.f32.mrf.mxu0
        %v1641 = vadd.f32 %v1568, %v1640
        %v1642 = vpop.f32.mrf.mxu0
        %v1643 = vadd.f32 %v1570, %v1642
        %1644 = vmatprep.mubr.bf16.mxu0 %v922
        %1645 = vmatmul.mubr.bf16.gmra.mxu0 %v921
        %v1646 = vpop.f32.mrf.mxu0
        %v1647 = vadd.f32 %v1574, %v1646
        %v1648 = vpop.f32.mrf.mxu0
        %v1649 = vadd.f32 %v1576, %v1648
        %v1650 = vpop.f32.mrf.mxu0
        %v1651 = vadd.f32 %v1578, %v1650
        %v1652 = vpop.f32.mrf.mxu0
        %v1653 = vadd.f32 %v1580, %v1652
        %1654 = vmatprep.mubr.bf16.mxu0 %v928
        %1655 = vmatmul.mubr.bf16.gmra.mxu0 %v927
        %v1656 = vpop.f32.mrf.mxu0
        %v1657 = vadd.f32 %v1584, %v1656
        %v1658 = vpop.f32.mrf.mxu0
        %v1659 = vadd.f32 %v1586, %v1658
        %v1660 = vpop.f32.mrf.mxu0
        %v1661 = vadd.f32 %v1588, %v1660
        %v1662 = vpop.f32.mrf.mxu0
        %v1663 = vadd.f32 %v1590, %v1662
        %1664 = vdwg.mxu0
        %1665 = vmatprep.subr.bf16.mxu0 %v1406
        %1666 = vmatpush1.bf16.msra.mxu0 %v1405
        %1667 = vmatprep.subr.bf16.mxu0 %v1404
        %1668 = vmatpush1.bf16.msra.mxu0 %v1403
        %1669 = vmatprep.subr.bf16.mxu0 %v1402
        %1670 = vmatpush1.bf16.msra.mxu0 %v1401
        %1671 = vmatprep.subr.bf16.mxu0 %v1400
        %1672 = vmatpush1.bf16.msra.mxu0 %v1399
        %1673 = vmatprep.subr.bf16.mxu0 %v1398
        %1674 = vmatpush1.bf16.msra.mxu0 %v1397
        %1675 = vmatprep.subr.bf16.mxu0 %v1396
        %1676 = vmatpush1.bf16.msra.mxu0 %v1395
        %1677 = vmatprep.subr.bf16.mxu0 %v1394
        %1678 = vmatpush1.bf16.msra.mxu0 %v1393
        %1679 = vmatprep.subr.bf16.mxu0 %v1392
        %1680 = vmatpush1.bf16.msra.mxu0 %v1391
        %1681 = vmatprep.subr.bf16.mxu0 %v1422
        %1682 = vmatpush2.bf16.msra.mxu0 %v1421
        %1683 = vmatprep.subr.bf16.mxu0 %v1420
        %1684 = vmatpush2.bf16.msra.mxu0 %v1419
        %1685 = vmatprep.subr.bf16.mxu0 %v1418
        %1686 = vmatpush2.bf16.msra.mxu0 %v1417
        %1687 = vmatprep.subr.bf16.mxu0 %v1416
        %1688 = vmatpush2.bf16.msra.mxu0 %v1415
        %1689 = vmatprep.subr.bf16.mxu0 %v1414
        %1690 = vmatpush2.bf16.msra.mxu0 %v1413
        %1691 = vmatprep.subr.bf16.mxu0 %v1412
        %1692 = vmatpush2.bf16.msra.mxu0 %v1411
        %1693 = vmatprep.subr.bf16.mxu0 %v1410
        %1694 = vmatpush2.bf16.msra.mxu0 %v1409
        %1695 = vmatprep.subr.bf16.mxu0 %v1408
        %1696 = vmatpush2.bf16.msra.mxu0 %v1407
        %1697 = vmatprep.mubr.bf16.mxu0 %v912
        %1698 = vmatmul.mubr.bf16.gmra.mxu0 %v911
        %v1699 = vpop.f32.mrf.mxu0
        %v1700 = vadd.f32 %v1627, %v1699
        %v1701 = vpop.f32.mrf.mxu0
        %v1702 = vadd.f32 %v1629, %v1701
        %v1703 = vpop.f32.mrf.mxu0
        %v1704 = vadd.f32 %v1631, %v1703
        %v1705 = vpop.f32.mrf.mxu0
        %v1706 = vadd.f32 %v1633, %v1705
        %1707 = vmatprep.mubr.bf16.mxu0 %v918
        %1708 = vmatmul.mubr.bf16.gmra.mxu0 %v917
        %v1709 = vpop.f32.mrf.mxu0
        %v1710 = vadd.f32 %v1637, %v1709
        %v1711 = vpop.f32.mrf.mxu0
        %v1712 = vadd.f32 %v1639, %v1711
        %v1713 = vpop.f32.mrf.mxu0
        %v1714 = vadd.f32 %v1641, %v1713
        %v1715 = vpop.f32.mrf.mxu0
        %v1716 = vadd.f32 %v1643, %v1715
        %1717 = vmatprep.mubr.bf16.mxu0 %v924
        %1718 = vmatmul.mubr.bf16.gmra.mxu0 %v923
        %v1719 = vpop.f32.mrf.mxu0
        %v1720 = vadd.f32 %v1647, %v1719
        %v1721 = vpop.f32.mrf.mxu0
        %v1722 = vadd.f32 %v1649, %v1721
        %v1723 = vpop.f32.mrf.mxu0
        %v1724 = vadd.f32 %v1651, %v1723
        %v1725 = vpop.f32.mrf.mxu0
        %v1726 = vadd.f32 %v1653, %v1725
        %1727 = vmatprep.mubr.bf16.mxu0 %v930
        %1728 = vmatmul.mubr.bf16.gmra.mxu0 %v929
        %v1729 = vpop.f32.mrf.mxu0
        %v1730 = vadd.f32 %v1657, %v1729
        %v1731 = vpop.f32.mrf.mxu0
        %v1732 = vadd.f32 %v1659, %v1731
        %v1733 = vpop.f32.mrf.mxu0
        %v1734 = vadd.f32 %v1661, %v1733
        %v1735 = vpop.f32.mrf.mxu0
        %v1736 = vadd.f32 %v1663, %v1735
        %1737 = vdwg.mxu0
        %v1738 = vmax.f32 %v1700, 0.0
        %v1739 = vmax.f32 %v1702, 0.0
        %v1740 = vmax.f32 %v1704, 0.0
        %v1741 = vmax.f32 %v1706, 0.0
        %v1742 = vmax.f32 %v1710, 0.0
        %v1743 = vmax.f32 %v1712, 0.0
        %v1744 = vmax.f32 %v1714, 0.0
        %v1745 = vmax.f32 %v1716, 0.0
        %v1746 = vmax.f32 %v1720, 0.0
        %v1747 = vmax.f32 %v1722, 0.0
        %v1748 = vmax.f32 %v1724, 0.0
        %v1749 = vmax.f32 %v1726, 0.0
        %v1750 = vmax.f32 %v1730, 0.0
        %v1751 = vmax.f32 %v1732, 0.0
        %v1752 = vmax.f32 %v1734, 0.0
        %v1753 = vmax.f32 %v1736, 0.0
        %v1754 = vpack.c.bf16 %v1740, %v1738
        %v1755 = vpack.c.bf16 %v1741, %v1739
        %v1756 = vpack.c.bf16 %v1744, %v1742
        %v1757 = vpack.c.bf16 %v1745, %v1743
        %v1758 = vpack.c.bf16 %v1748, %v1746
        %v1759 = vpack.c.bf16 %v1749, %v1747
        %v1760 = vpack.c.bf16 %v1752, %v1750
        %v1761 = vpack.c.bf16 %v1753, %v1751
        %v1762 = vld [vmem:[%s5] sm:$0xf]
        %v1763 = vld [vmem:[%s5 + $0x4] sm:$0xf]
        %v1764 = vld [vmem:[%s5 + $0x8] sm:$0xf]
        %v1765 = vld [vmem:[%s5 + $0xc] sm:$0xf]
        %v1766 = vld [vmem:[%s5 + $0x10] sm:$0xf]
        %v1767 = vld [vmem:[%s5 + $0x14] sm:$0xf]
        %v1768 = vld [vmem:[%s5 + $0x18] sm:$0xf]
        %v1769 = vld [vmem:[%s5 + $0x1c] sm:$0xf]
        %v1770 = vld [vmem:[%s5 + $0x20] sm:$0xf]
        %v1771 = vld [vmem:[%s5 + $0x24] sm:$0xf]
        %v1772 = vld [vmem:[%s5 + $0x28] sm:$0xf]
        %v1773 = vld [vmem:[%s5 + $0x2c] sm:$0xf]
        %v1774 = vld [vmem:[%s5 + $0x30] sm:$0xf]
        %v1775 = vld [vmem:[%s5 + $0x34] sm:$0xf]
        %v1776 = vld [vmem:[%s5 + $0x38] sm:$0xf]
        %v1777 = vld [vmem:[%s5 + $0x3c] sm:$0xf]
        %v1778 = vld [vmem:[%s5 + $0x40] sm:$0xf]
        %v1779 = vld [vmem:[%s5 + $0x44] sm:$0xf]
        %v1780 = vld [vmem:[%s5 + $0x48] sm:$0xf]
        %v1781 = vld [vmem:[%s5 + $0x4c] sm:$0xf]
        %v1782 = vld [vmem:[%s5 + $0x50] sm:$0xf]
        %v1783 = vld [vmem:[%s5 + $0x54] sm:$0xf]
        %v1784 = vld [vmem:[%s5 + $0x58] sm:$0xf]
        %v1785 = vld [vmem:[%s5 + $0x5c] sm:$0xf]
        %v1786 = vld [vmem:[%s5 + $0x60] sm:$0xf]
        %v1787 = vld [vmem:[%s5 + $0x64] sm:$0xf]
        %v1788 = vld [vmem:[%s5 + $0x68] sm:$0xf]
        %v1789 = vld [vmem:[%s5 + $0x6c] sm:$0xf]
        %v1790 = vld [vmem:[%s5 + $0x70] sm:$0xf]
        %v1791 = vld [vmem:[%s5 + $0x74] sm:$0xf]
        %v1792 = vld [vmem:[%s5 + $0x78] sm:$0xf]
        %v1793 = vld [vmem:[%s5 + $0x7c] sm:$0xf]
        %v1794 = vld [vmem:[%s6] sm:$0xff]
        %v1795 = vld [vmem:[%s6 + $0x8] sm:$0xff]
        %v1796 = vld [vmem:[%s6 + $0x10] sm:$0xff]
        %v1797 = vld [vmem:[%s6 + $0x18] sm:$0xff]
        %v1798 = vld [vmem:[%s6 + $0x20] sm:$0xff]
        %v1799 = vld [vmem:[%s6 + $0x28] sm:$0xff]
        %v1800 = vld [vmem:[%s6 + $0x30] sm:$0xff]
        %v1801 = vld [vmem:[%s6 + $0x38] sm:$0xff]
        %v1834 = vunpack.c.l.b16 %v1762
        %v1835 = vunpack.c.l.b16 %v1763
        %v1836 = vunpack.c.l.b16 %v1764
        %v1837 = vunpack.c.l.b16 %v1765
        %v1838 = vunpack.c.l.b16 %v1766
        %v1839 = vunpack.c.l.b16 %v1767
        %v1840 = vunpack.c.l.b16 %v1768
        %v1841 = vunpack.c.l.b16 %v1769
        %v1842 = vunpack.c.l.b16 %v1770
        %v1843 = vunpack.c.l.b16 %v1771
        %v1844 = vunpack.c.l.b16 %v1772
        %v1845 = vunpack.c.l.b16 %v1773
        %v1846 = vunpack.c.l.b16 %v1774
        %v1847 = vunpack.c.l.b16 %v1775
        %v1848 = vunpack.c.l.b16 %v1776
        %v1849 = vunpack.c.l.b16 %v1777
        %v1850 = vunpack.c.l.b16 %v1778
        %v1851 = vunpack.c.l.b16 %v1779
        %v1852 = vunpack.c.l.b16 %v1780
        %v1853 = vunpack.c.l.b16 %v1781
        %v1854 = vunpack.c.l.b16 %v1782
        %v1855 = vunpack.c.l.b16 %v1783
        %v1856 = vunpack.c.l.b16 %v1784
        %v1857 = vunpack.c.l.b16 %v1785
        %v1858 = vunpack.c.l.b16 %v1786
        %v1859 = vunpack.c.l.b16 %v1787
        %v1860 = vunpack.c.l.b16 %v1788
        %v1861 = vunpack.c.l.b16 %v1789
        %v1862 = vunpack.c.l.b16 %v1790
        %v1863 = vunpack.c.l.b16 %v1791
        %v1864 = vunpack.c.l.b16 %v1792
        %v1865 = vunpack.c.l.b16 %v1793
        %v1866 = vpack.c.b16 %v1835, %v1834
        %v1867 = vpack.c.b16 %v1837, %v1836
        %v1868 = vpack.c.b16 %v1839, %v1838
        %v1869 = vpack.c.b16 %v1841, %v1840
        %v1870 = vpack.c.b16 %v1843, %v1842
        %v1871 = vpack.c.b16 %v1845, %v1844
        %v1872 = vpack.c.b16 %v1847, %v1846
        %v1873 = vpack.c.b16 %v1849, %v1848
        %v1874 = vpack.c.b16 %v1851, %v1850
        %v1875 = vpack.c.b16 %v1853, %v1852
        %v1876 = vpack.c.b16 %v1855, %v1854
        %v1877 = vpack.c.b16 %v1857, %v1856
        %v1878 = vpack.c.b16 %v1859, %v1858
        %v1879 = vpack.c.b16 %v1861, %v1860
        %v1880 = vpack.c.b16 %v1863, %v1862
        %v1881 = vpack.c.b16 %v1865, %v1864
        %1898 = vmatprep.subr.bf16.mxu0 0
        %1899 = vmatpush1.bf16.msra.mxu0 %v1873
        %1900 = vmatprep.subr.bf16.mxu0 0
        %1901 = vmatpush1.bf16.msra.mxu0 %v1872
        %1902 = vmatprep.subr.bf16.mxu0 0
        %1903 = vmatpush1.bf16.msra.mxu0 %v1871
        %1904 = vmatprep.subr.bf16.mxu0 0
        %1905 = vmatpush1.bf16.msra.mxu0 %v1870
        %1906 = vmatprep.subr.bf16.mxu0 0
        %1907 = vmatpush1.bf16.msra.mxu0 %v1869
        %1908 = vmatprep.subr.bf16.mxu0 0
        %1909 = vmatpush1.bf16.msra.mxu0 %v1868
        %1910 = vmatprep.subr.bf16.mxu0 0
        %1911 = vmatpush1.bf16.msra.mxu0 %v1867
        %1912 = vmatprep.subr.bf16.mxu0 0
        %1913 = vmatpush1.bf16.msra.mxu0 %v1866
        %1914 = vmatprep.subr.bf16.mxu0 0
        %1915 = vmatpush2.bf16.msra.mxu0 %v1881
        %1916 = vmatprep.subr.bf16.mxu0 0
        %1917 = vmatpush2.bf16.msra.mxu0 %v1880
        %1918 = vmatprep.subr.bf16.mxu0 0
        %1919 = vmatpush2.bf16.msra.mxu0 %v1879
        %1920 = vmatprep.subr.bf16.mxu0 0
        %1921 = vmatpush2.bf16.msra.mxu0 %v1878
        %1922 = vmatprep.subr.bf16.mxu0 0
        %1923 = vmatpush2.bf16.msra.mxu0 %v1877
        %1924 = vmatprep.subr.bf16.mxu0 0
        %1925 = vmatpush2.bf16.msra.mxu0 %v1876
        %1926 = vmatprep.subr.bf16.mxu0 0
        %1927 = vmatpush2.bf16.msra.mxu0 %v1875
        %1928 = vmatprep.subr.bf16.mxu0 0
        %1929 = vmatpush2.bf16.msra.mxu0 %v1874
        %1930 = vmatprep.mubr.bf16.mxu0 %v1755
        %1931 = vmatmul.mubr.bf16.gmra.mxu0 %v1754
        %v1932 = vpop.f32.mrf.mxu0
        %v1933 = vadd.f32 %v1794, %v1932
        %v1934 = vpop.f32.mrf.mxu0
        %v1935 = vpop.f32.mrf.mxu0
        %v1936 = vadd.f32 %v1795, %v1935
        %v1937 = vpop.f32.mrf.mxu0
        %1938 = vmatprep.mubr.bf16.mxu0 %v1757
        %1939 = vmatmul.mubr.bf16.gmra.mxu0 %v1756
        %v1940 = vpop.f32.mrf.mxu0
        %v1941 = vadd.f32 %v1796, %v1940
        %v1942 = vpop.f32.mrf.mxu0
        %v1943 = vpop.f32.mrf.mxu0
        %v1944 = vadd.f32 %v1797, %v1943
        %v1945 = vpop.f32.mrf.mxu0
        %1946 = vmatprep.mubr.bf16.mxu0 %v1759
        %1947 = vmatmul.mubr.bf16.gmra.mxu0 %v1758
        %v1948 = vpop.f32.mrf.mxu0
        %v1949 = vadd.f32 %v1798, %v1948
        %v1950 = vpop.f32.mrf.mxu0
        %v1951 = vpop.f32.mrf.mxu0
        %v1952 = vadd.f32 %v1799, %v1951
        %v1953 = vpop.f32.mrf.mxu0
        %1954 = vmatprep.mubr.bf16.mxu0 %v1761
        %1955 = vmatmul.mubr.bf16.gmra.mxu0 %v1760
        %v1956 = vpop.f32.mrf.mxu0
        %v1957 = vadd.f32 %v1800, %v1956
        %v1958 = vpop.f32.mrf.mxu0
        %v1959 = vpop.f32.mrf.mxu0
        %v1960 = vadd.f32 %v1801, %v1959
        %v1961 = vpop.f32.mrf.mxu0
        %1962 = vdwg.mxu0
        %1963 = vst [vmem:[%s287] sm:$0xff] %v1933
        %1964 = vst [vmem:[%s287 + $0x8] sm:$0xff] %v1936
        %1965 = vst [vmem:[%s287 + $0x10] sm:$0xff] %v1941
        %1966 = vst [vmem:[%s287 + $0x18] sm:$0xff] %v1944
        %1967 = vst [vmem:[%s287 + $0x20] sm:$0xff] %v1949
        %1968 = vst [vmem:[%s287 + $0x28] sm:$0xff] %v1952
        %1969 = vst [vmem:[%s287 + $0x30] sm:$0xff] %v1957
        %1970 = vst [vmem:[%s287 + $0x38] sm:$0xff] %v1960
        %s1971 = sand.u32 %s182, 1
        %s1972 = scalar_lea.sflag [#allocation5], %s1971
        %s1973 = sand.u32 %s182, 1
        %s1974 = smul.addr %s1973, 64
        %s1975 = scalar_lea.vmem [#allocation6], %s1974
        // Predicated region
        $region53: #{tpu_custom_call.1} parent=47 // pred_check
          %p1976 = pneg %p192
        $region54: #{tpu_custom_call.1} parent=47 // pred_check_branch
          %1978 = sbr.rel (%p1976) target = $region56
        $region55: #{tpu_custom_call.1} parent=47 // pred_region
          %s1979 = smul.u32 8, %s22
          %s1981 = ssub.s32 1024, 1024
          %1982 = vsyncadd %s1972, %s1981
          %s1983 = smul.addr %s1979, 128
          %s1984 = scalar_lea.hbm %s7, %s1983
          %s1985 = sshll.u32 %s1975, 4
          %s1986 = int_to_ptr.vmem [resolvable:$true] %s1985
          %1991 = dma.vmem_to_hbm [thread:$0]  %s1986, 1024, %s1984, %s1972, 128, 128, 8
        $region56: #{tpu_custom_call.1} parent=47 // pred_fallthru
          _
      $region48: #{tpu_custom_call.1} parent=5 // pred_fallthru
        _
      %p1992 = scmp.le.s32.totalorder 2, %s17
      // Predicated region
      $region57: #{tpu_custom_call.1} parent=5 // pred_check
        %p1993 = pneg %p1992
      $region58: #{tpu_custom_call.1} parent=5 // pred_check_branch
        %1995 = sbr.rel (%p1993) target = $region60
      $region59: #{tpu_custom_call.1} parent=5 // pred_region
        %s1996 = ssub.s32 %s17, 2
        // Predicated region
        $region61: #{tpu_custom_call.1} parent=59 // pred_check
          %p1997 = pneg %p198
        $region62: #{tpu_custom_call.1} parent=59 // pred_check_branch
          %1999 = sbr.rel (%p1997) target = $region64
        $region63: #{tpu_custom_call.1} parent=59 // pred_region
          %s2000 = sand.u32 %s183, 1
          %s2001 = scalar_lea.sflag [#allocation5], %s2000
          %s2002 = sand.u32 %s183, 1
          %s2003 = smul.addr %s2002, 64
          %s2004 = scalar_lea.vmem [#allocation6], %s2003
          %2005 = dma.done %s2001, 1024
        $region64: #{tpu_custom_call.1} parent=59 // pred_fallthru
          _
      $region60: #{tpu_custom_call.1} parent=5 // pred_fallthru
        _
    $region6: #{tpu_custom_call.1} parent=1 // loop_footer
      %s21 = sadd.s32 1, %s17
    $region7: #{tpu_custom_call.1} parent=1 // loop_footer_branch
      %16 = sbr.rel target = $region3
    $region8: #{tpu_custom_call.1} parent=1 // loop_exit
      _
    %2006 = vsyncpa [#allocation4], 1
    %s2007 = scalar_lea.sflag [#allocation4], 1
    %2008 = vsyncpa %s2007, 1
    %2009 = vsyncpa [#allocation5], 1
    %s2010 = scalar_lea.sflag [#allocation5], 1
    %2011 = vsyncpa %s2010, 1

</llo_original>
